<compile_context>
chip_gen: v5e
topology: v5e:2x2
jax: 0.10.0
libtpu: 0.0.40
codegen_flags: <defaults>
</compile_context>

<pallas_src>
import math
import functools

import jax
import jax.numpy as jnp
from jax import lax
from jax.experimental import pallas as pl
from jax.experimental.pallas import tpu as pltpu


def _mdwconv_kernel(mod_ref, xc_ref, xt_ref, xb_ref, wdw_ref, wperm_ref, o_ref,
                    xpad_ref, *, TH, W, K, CH, mxu_dtype):
    """One (batch, row-strip) tile of the fused modulated depthwise-separable conv.

    mod_ref   : (1, C_in)              per-sample modulation (scale applied), f32
    xc_ref    : (TH, W, C_in)          current row strip
    xt_ref    : (P, W, C_in)           rows just above the strip (unused when h == 0)
    xb_ref    : (P, W, C_in)           rows just below the strip (unused on last strip)
    wdw_ref   : (K*K, C_in)            depthwise taps, f32
    wperm_ref : (C_in, Cp)             1x1 weights, demodulation pre-folded, mxu_dtype
    o_ref     : (TH*W, Cp)             output block (lane-dense when C_out >= 128)
    xpad_ref  : (TH+2P, W+2P, C_in)    scratch: padded input window (persistent scratch)
    """
    P = K // 2
    C_in = wdw_ref.shape[1]
    h = pl.program_id(1)
    n_h = pl.num_programs(1)
    pdt = xpad_ref.dtype

    # ---- stage the current strip into the centre of the padded window.
    xpad_ref[P:P + TH, P:P + W, :] = xc_ref[...].astype(pdt)

    if P > 0:
        # Border-only zeroing (the old full-window zero was a strip-sized vst pass):
        #   * left/right pad columns are never written by any copy -> zero every step,
        #   * top/bottom pad rows are either the neighbour strip's rows or zero.
        xpad_ref[:, 0:P, :] = jnp.zeros((TH + 2 * P, P, C_in), pdt)
        xpad_ref[:, P + W:P + W + P, :] = jnp.zeros((TH + 2 * P, P, C_in), pdt)

        @pl.when(h > 0)
        def _():
            xpad_ref[0:P, P:P + W, :] = xt_ref[...].astype(pdt)

        @pl.when(h == 0)
        def _():
            xpad_ref[0:P, P:P + W, :] = jnp.zeros((P, W, C_in), pdt)

        @pl.when(h < n_h - 1)
        def _():
            xpad_ref[P + TH:P + TH + P, P:P + W, :] = xb_ref[...].astype(pdt)

        @pl.when(h == n_h - 1)
        def _():
            xpad_ref[P + TH:P + TH + P, P:P + W, :] = jnp.zeros((P, W, C_in), pdt)

    # ---- fold the per-sample modulation into the K*K depthwise taps: (K*K, C_in), f32.
    w_taps = wdw_ref[...] * mod_ref[...]

    # ---- chunked shift-and-accumulate depthwise conv + per-chunk 1x1 MXU matmul.
    # Small per-chunk accumulators keep the tap loop out of a strip-sized VMEM temporary
    # and let MXU matmuls of one chunk co-issue with VPU tap work of the next.
    n_chunks = TH // CH
    for c in range(n_chunks):
        r0 = c * CH
        acc = None
        for t in range(K * K):
            dy, dx = divmod(t, K)
            win = xpad_ref[dy + r0:dy + r0 + CH, dx:dx + W, :]
            contrib = win * w_taps[t:t + 1, :]                  # promotes to f32
            acc = contrib if acc is None else acc + contrib     # (CH, W, C_in) f32
        y = jnp.dot(acc.reshape(CH * W, C_in).astype(mxu_dtype), wperm_ref[...],
                    preferred_element_type=jnp.float32)         # (CH*W, Cp)
        o_ref[r0 * W:(r0 + CH) * W, :] = y.astype(o_ref.dtype)


def _detect_vmem_capacity_bytes():
    """Best-effort per-core VMEM capacity; conservative 64 MiB fallback (v7x)."""
    try:
        info = pltpu.get_tpu_info()
        cap = getattr(info, "vmem_capacity_bytes", None)
        if cap:
            return int(cap)
    except Exception:
        pass
    try:
        kind = jax.devices()[0].device_kind.lower()
        if "v7" in kind:
            return 64 << 20
        if "v5" in kind or "v6" in kind:
            return 128 << 20
    except Exception:
        pass
    return 64 << 20


def _choose_row_tile(B, H, halo, footprint, budget):
    """Largest row-strip TH dividing H (multiple of the halo and of 8 when possible) whose
    pipelined VMEM footprint fits the budget; prefers >=8 total grid steps (v7x megacore)."""
    cands = [t for t in range(H, 0, -1)
             if H % t == 0 and t % halo == 0 and (t % 8 == 0 or t == H)]
    if not cands:
        cands = [t for t in range(H, 0, -1) if H % t == 0 and t % halo == 0]
    if not cands:
        cands = [H]
    fits = [t for t in cands if footprint(t) <= budget]
    if not fits:
        return min(cands)             # nothing fits: smallest legal working set
    for min_steps in (8, 4, 2):
        pref = [t for t in fits if B * (H // t) >= min_steps]
        if pref:
            return max(pref)
    return max(fits)


def _choose_chunk(TH, W):
    """Row-chunk size: divides TH, targets ~512 rows of the (TH*W, C_in) matmul per chunk."""
    target = max(1, min(TH, -(-512 // W)))      # ceil(512 / W), clamped to [1, TH]
    best = 1
    for c in range(1, TH + 1):
        if TH % c == 0 and c <= target:
            best = c
    return best


def modulated_dwconv2d(x_nchw, style, weight_dw, weight_permute, wmod_t, bmod,
                       style_inv=None, *, demodulate=True):
    """x_nchw: (B, C_in, H, W), style: (B, style_dim). Returns (B, C_out, H, W)."""
    B, C_in, H, W = x_nchw.shape
    C_out = weight_permute.shape[0]
    K = weight_dw.shape[-1]
    P = K // 2
    Ph = max(P, 1)                               # halo block size (K=1 degenerates cleanly)
    scale = 1.0 / math.sqrt(C_in * K * K)

    in_dtype = x_nchw.dtype
    is_bf16 = jnp.dtype(in_dtype) == jnp.dtype(jnp.bfloat16)
    # precision-preserving MXU path for f32 activations; bf16 operands for bf16 inputs.
    mxu_dtype = jnp.bfloat16 if is_bf16 else jnp.float32
    # bf16 halo scratch only when activations are already bf16 (halves VMEM + copy-in);
    # f32 activations keep an f32 scratch (also the right call on v5e: no bf16 VPU).
    xpad_dtype = jnp.bfloat16 if is_bf16 else jnp.float32

    # --- glue: NCHW -> NHWC (channels on lanes). No spatial pad (halo is in-kernel).
    x = jnp.transpose(x_nchw, (0, 2, 3, 1))

    # --- per-sample modulation, precomputed once: (B, 1, C_in)
    mod = scale * (style.astype(jnp.float32) @ wmod_t + bmod.reshape(1, C_in))
    mod = mod.reshape(B, 1, C_in)

    # --- depthwise taps as (K*K, C_in), f32
    wdw = jnp.transpose(weight_dw[:, 0, :, :], (1, 2, 0)).reshape(K * K, C_in)
    wdw = wdw.astype(jnp.float32)

    # --- 1x1 weights (C_in, C_out) with batch-invariant demodulation folded in.
    # The module demodulates with the fixed `style_inv` buffer (not the per-sample mod),
    # so the rsqrt factor depends only on weights and lives entirely in wperm.
    wperm = jnp.transpose(weight_permute[:, :, 0, 0], (1, 0)).astype(jnp.float32)
    if demodulate:
        s_dw = jnp.sum(weight_dw[:, 0, :, :].astype(jnp.float32) ** 2, axis=(1, 2))   # (C_in,)
        v = (scale * style_inv.reshape(C_in).astype(jnp.float32)) ** 2 * s_dw          # (C_in,)
        denom = (weight_permute[:, :, 0, 0].astype(jnp.float32) ** 2) @ v + 1e-8        # (C_out,)
        wperm = wperm * lax.rsqrt(denom)[None, :]

    # --- output-channel padding: lane-dense (multiple of 128) only when C_out >= 128;
    # tiny heads keep Cp == C_out (masked tail store beats an 8x writeback inflation).
    Cp = ((C_out + 127) // 128) * 128 if C_out >= 128 else C_out
    wperm_k = jnp.pad(wperm, ((0, 0), (0, Cp - C_out))).astype(mxu_dtype)

    # --- VMEM-budgeted row-strip tiling (per-generation budget via detected VMEM capacity).
    assert H % Ph == 0, "H must be a multiple of the halo size (K//2)"  # TODO(synk): ragged H
    in_b = jnp.dtype(in_dtype).itemsize
    xpad_b = jnp.dtype(xpad_dtype).itemsize
    mxu_b = jnp.dtype(mxu_dtype).itemsize
    w_bytes = (K * K) * C_in * 4 + C_in * Cp * mxu_b + 2 * C_in * 4

    def footprint(th):
        xc = 2 * th * W * C_in * in_b                    # double-buffered input strip
        halos = 2 * 2 * Ph * W * C_in * in_b             # double-buffered top+bottom halos
        out = 2 * th * W * Cp * in_b                     # double-buffered output block
        xpad = (th + 2 * P) * (W + 2 * P) * C_in * xpad_b
        return xc + halos + out + xpad + 2 * w_bytes

    vmem_cap = _detect_vmem_capacity_bytes()
    budget = int(vmem_cap * 0.70)                        # ~44 MiB on v7x, ~90 MiB on v5e/v6e
    TH = _choose_row_tile(B, H, Ph, footprint, budget)
    assert H % TH == 0 and TH % Ph == 0
    nH = H // TH
    halo_blocks = TH // Ph
    CH = _choose_chunk(TH, W)
    vmem_limit = int(min(vmem_cap * 0.85, max(footprint(TH) + (8 << 20), 32 << 20)))

    kernel = functools.partial(_mdwconv_kernel, TH=TH, W=W, K=K, CH=CH, mxu_dtype=mxu_dtype)

    in_specs = [
        pl.BlockSpec((None, 1, C_in), lambda b, h: (b, 0, 0)),               # mod (per-sample)
        pl.BlockSpec((None, TH, W, C_in), lambda b, h: (b, h, 0, 0)),        # x row strip
        pl.BlockSpec((None, Ph, W, C_in),                                    # top halo rows
                     lambda b, h: (b, jnp.maximum(h * halo_blocks - 1, 0), 0, 0)),
        pl.BlockSpec((None, Ph, W, C_in),                                    # bottom halo rows
                     lambda b, h: (b, jnp.minimum(h * halo_blocks + halo_blocks,
                                                  H // Ph - 1), 0, 0)),
        pl.BlockSpec((K * K, C_in), lambda b, h: (0, 0)),                    # depthwise taps
        pl.BlockSpec((C_in, Cp), lambda b, h: (0, 0)),                       # 1x1 w (demod folded)
    ]
    out_specs = pl.BlockSpec((None, TH * W, Cp), lambda b, h: (b, h, 0))

    out = pl.pallas_call(
        kernel,
        out_shape=jax.ShapeDtypeStruct((B, H * W, Cp), in_dtype),
        grid_spec=pltpu.PrefetchScalarGridSpec(
            num_scalar_prefetch=0,
            grid=(B, nH),
            in_specs=in_specs,
            out_specs=out_specs,
            scratch_shapes=[pltpu.VMEM((TH + 2 * P, W + 2 * P, C_in), xpad_dtype)],
        ),
        # Each (batch, strip) writes a disjoint output block -> both axes are parallel
        # (lets v7x's 2 TensorCores split the grid; harmless on single-TC v5e/v6e).
        compiler_params=pltpu.CompilerParams(
            dimension_semantics=("parallel", "parallel"),
            vmem_limit_bytes=vmem_limit),
    )(mod, x, x, x, wdw, wperm_k)

    # glue: strip channel padding (if any), restore NCHW
    out = out.reshape(B, H, W, Cp)
    if Cp != C_out:
        out = out[..., :C_out]
    return jnp.transpose(out, (0, 3, 1, 2))


def reference_forward(x, style, weight_dw, weight_permute, wmod_t, bmod,
                      style_inv, *, demodulate=True):
    B, C_in, H, W = x.shape
    K = weight_dw.shape[-1]
    P = K // 2
    scale = 1.0 / math.sqrt(C_in * K * K)

    mod = scale * (style @ wmod_t + bmod)                       # (B, C_in)
    xm = x * mod[:, :, None, None]
    dn = ("NCHW", "OIHW", "NCHW")
    y = lax.conv_general_dilated(xm, weight_dw, (1, 1), [(P, P), (P, P)],
                                 dimension_numbers=dn, feature_group_count=C_in)
    y = lax.conv_general_dilated(y, weight_permute, (1, 1), "VALID",
                                 dimension_numbers=dn)
    if demodulate:
        w = jnp.transpose(weight_dw, (1, 0, 2, 3))[None] * weight_permute[None]  # (1,Cout,Cin,K,K)
        si = style_inv.reshape(1, 1, C_in, 1, 1)
        norm = lax.rsqrt(jnp.sum((scale * si * w) ** 2, axis=(2, 3, 4)) + 1e-8)   # (1, Cout)
        y = y * norm[:, :, None, None]
    return y


if __name__ == "__main__":
    B, C_in, C_out, style_dim, K, H, W = 2, 8, 16, 8, 3, 16, 16

    key = jax.random.PRNGKey(0)
    k1, k2, k3, k4, k5, k6 = jax.random.split(key, 6)

    # deterministic synthetic parameters (shapes from the module's __init__)
    weight_dw = jax.random.normal(k1, (C_in, 1, K, K), jnp.float32)
    weight_permute = jax.random.normal(k2, (C_out, C_in, 1, 1), jnp.float32)
    wmod_t = jax.random.normal(k3, (style_dim, C_in), jnp.float32) / math.sqrt(style_dim)
    bmod = jnp.ones((C_in,), jnp.float32)          # modulation.bias.data.fill_(1.0)
    style_inv = jax.random.normal(k4, (1, 1, C_in, 1, 1), jnp.float32)

    # inputs
    x = jax.random.normal(k5, (B, C_in, H, W), jnp.float32)
    style = jax.random.normal(k6, (B, style_dim), jnp.float32)

    out = modulated_dwconv2d(x, style, weight_dw, weight_permute, wmod_t, bmod,
                             style_inv, demodulate=True)
    out = jax.block_until_ready(out)

    ref = reference_forward(x, style, weight_dw, weight_permute, wmod_t, bmod,
                            style_inv, demodulate=True)
    assert out.shape == (B, C_out, H, W)
    # f32 activations keep f32 MXU operands (no silent bf16 downgrade); tolerance stays
    # loose enough to also cover the bf16 path used for bf16 activations.
    assert jnp.allclose(out, ref, rtol=2e-2, atol=2e-2), "mismatch vs JAX reference"

    print("KERNEL_OK")
</pallas_src>

<mosaic_0001>
module attributes {stable_mosaic.version = 11 : i64} {
  func.func @_mdwconv_kernel(%arg0: i32, %arg1: i32, %arg2: memref<1x1x8xf32, #tpu.memory_space<vmem>>, %arg3: memref<1x8x16x8xf32, #tpu.memory_space<vmem>>, %arg4: memref<1x1x16x8xf32, #tpu.memory_space<vmem>>, %arg5: memref<1x1x16x8xf32, #tpu.memory_space<vmem>>, %arg6: memref<9x8xf32, #tpu.memory_space<vmem>>, %arg7: memref<8x16xf32, #tpu.memory_space<vmem>>, %arg8: memref<1x128x16xf32, #tpu.memory_space<vmem>>, %arg9: memref<10x18x8xf32, #tpu.memory_space<vmem>>) attributes {dimension_semantics = [#tpu.dimension_semantics<parallel>, #tpu.dimension_semantics<parallel>], iteration_bounds = array<i64: 2, 2>, scalar_prefetch = 0 : i64, scratch_operands = 1 : i64, tpu.core_type = #tpu.core_type<tc>, window_params = [{transform_indices = @transform_0, window_bounds = array<i64: 1, 1, 8>}, {transform_indices = @transform_1, window_bounds = array<i64: 1, 8, 16, 8>}, {transform_indices = @transform_2, window_bounds = array<i64: 1, 1, 16, 8>}, {transform_indices = @transform_3, window_bounds = array<i64: 1, 1, 16, 8>}, {pipeline_mode = #tpu.pipeline_mode<synchronous>, transform_indices = @transform_4, window_bounds = array<i64: 9, 8>}, {pipeline_mode = #tpu.pipeline_mode<synchronous>, transform_indices = @transform_5, window_bounds = array<i64: 8, 16>}, {transform_indices = @transform_6, window_bounds = array<i64: 1, 128, 16>}]} {
    %c0 = arith.constant 0 : index
    %c0_0 = arith.constant 0 : index
    %c0_1 = arith.constant 0 : index
    %c0_2 = arith.constant 0 : index
    %0 = vector.load %arg3[%c0, %c0_0, %c0_1, %c0_2] : memref<1x8x16x8xf32, #tpu.memory_space<vmem>>, vector<1x8x16x8xf32>
    %1 = vector.shape_cast %0 : vector<1x8x16x8xf32> to vector<8x16x8xf32>
    %c1 = arith.constant 1 : index
    %c1_3 = arith.constant 1 : index
    %c0_4 = arith.constant 0 : index
    %2 = vector.load %arg9[%c1, %c1_3, %c0_4] : memref<10x18x8xf32, #tpu.memory_space<vmem>>, vector<8x16x8xf32>
    tpu.vector_store %arg9[%c1, %c1_3, %c0_4], %1 {strides = array<i32>} : memref<10x18x8xf32, #tpu.memory_space<vmem>>, vector<8x16x8xf32>,
    %cst = arith.constant 0.000000e+00 : f32
    %3 = vector.broadcast %cst : f32 to vector<10x1x8xf32>
    %c0_5 = arith.constant 0 : index
    %c0_6 = arith.constant 0 : index
    %c0_7 = arith.constant 0 : index
    %4 = vector.load %arg9[%c0_5, %c0_6, %c0_7] : memref<10x18x8xf32, #tpu.memory_space<vmem>>, vector<10x1x8xf32>
    tpu.vector_store %arg9[%c0_5, %c0_6, %c0_7], %3 {strides = array<i32>} : memref<10x18x8xf32, #tpu.memory_space<vmem>>, vector<10x1x8xf32>,
    %cst_8 = arith.constant 0.000000e+00 : f32
    %5 = vector.broadcast %cst_8 : f32 to vector<10x1x8xf32>
    %c0_9 = arith.constant 0 : index
    %c17 = arith.constant 17 : index
    %c0_10 = arith.constant 0 : index
    %6 = vector.load %arg9[%c0_9, %c17, %c0_10] : memref<10x18x8xf32, #tpu.memory_space<vmem>>, vector<10x1x8xf32>
    tpu.vector_store %arg9[%c0_9, %c17, %c0_10], %5 {strides = array<i32>} : memref<10x18x8xf32, #tpu.memory_space<vmem>>, vector<10x1x8xf32>,
    %c0_i32 = arith.constant 0 : i32
    %7 = arith.cmpi sgt, %arg1, %c0_i32 : i32
    %8 = arith.extui %7 : i1 to i32
    %c0_i32_11 = arith.constant 0 : i32
    %9 = arith.cmpi ne, %8, %c0_i32_11 : i32
    scf.if %9 {
      %c0_54 = arith.constant 0 : index
      %c0_55 = arith.constant 0 : index
      %c0_56 = arith.constant 0 : index
      %c0_57 = arith.constant 0 : index
      %83 = vector.load %arg4[%c0_54, %c0_55, %c0_56, %c0_57] : memref<1x1x16x8xf32, #tpu.memory_space<vmem>>, vector<1x1x16x8xf32>
      %84 = vector.shape_cast %83 : vector<1x1x16x8xf32> to vector<1x16x8xf32>
      %c0_58 = arith.constant 0 : index
      %c1_59 = arith.constant 1 : index
      %c0_60 = arith.constant 0 : index
      %85 = vector.load %arg9[%c0_58, %c1_59, %c0_60] : memref<10x18x8xf32, #tpu.memory_space<vmem>>, vector<1x16x8xf32>
      tpu.vector_store %arg9[%c0_58, %c1_59, %c0_60], %84 {strides = array<i32>} : memref<10x18x8xf32, #tpu.memory_space<vmem>>, vector<1x16x8xf32>,
    } else {
    }
    %c0_i32_12 = arith.constant 0 : i32
    %10 = arith.cmpi eq, %arg1, %c0_i32_12 : i32
    %11 = arith.extui %10 : i1 to i32
    %c0_i32_13 = arith.constant 0 : i32
    %12 = arith.cmpi ne, %11, %c0_i32_13 : i32
    scf.if %12 {
      %cst_54 = arith.constant 0.000000e+00 : f32
      %83 = vector.broadcast %cst_54 : f32 to vector<1x16x8xf32>
      %c0_55 = arith.constant 0 : index
      %c1_56 = arith.constant 1 : index
      %c0_57 = arith.constant 0 : index
      %84 = vector.load %arg9[%c0_55, %c1_56, %c0_57] : memref<10x18x8xf32, #tpu.memory_space<vmem>>, vector<1x16x8xf32>
      tpu.vector_store %arg9[%c0_55, %c1_56, %c0_57], %83 {strides = array<i32>} : memref<10x18x8xf32, #tpu.memory_space<vmem>>, vector<1x16x8xf32>,
    } else {
    }
    %c1_i32 = arith.constant 1 : i32
    %13 = arith.cmpi slt, %arg1, %c1_i32 : i32
    %14 = arith.extui %13 : i1 to i32
    %c0_i32_14 = arith.constant 0 : i32
    %15 = arith.cmpi ne, %14, %c0_i32_14 : i32
    scf.if %15 {
      %c0_54 = arith.constant 0 : index
      %c0_55 = arith.constant 0 : index
      %c0_56 = arith.constant 0 : index
      %c0_57 = arith.constant 0 : index
      %83 = vector.load %arg5[%c0_54, %c0_55, %c0_56, %c0_57] : memref<1x1x16x8xf32, #tpu.memory_space<vmem>>, vector<1x1x16x8xf32>
      %84 = vector.shape_cast %83 : vector<1x1x16x8xf32> to vector<1x16x8xf32>
      %c9 = arith.constant 9 : index
      %c1_58 = arith.constant 1 : index
      %c0_59 = arith.constant 0 : index
      %85 = vector.load %arg9[%c9, %c1_58, %c0_59] : memref<10x18x8xf32, #tpu.memory_space<vmem>>, vector<1x16x8xf32>
      tpu.vector_store %arg9[%c9, %c1_58, %c0_59], %84 {strides = array<i32>} : memref<10x18x8xf32, #tpu.memory_space<vmem>>, vector<1x16x8xf32>,
    } else {
    }
    %c1_i32_15 = arith.constant 1 : i32
    %16 = arith.cmpi eq, %arg1, %c1_i32_15 : i32
    %17 = arith.extui %16 : i1 to i32
    %c0_i32_16 = arith.constant 0 : i32
    %18 = arith.cmpi ne, %17, %c0_i32_16 : i32
    scf.if %18 {
      %cst_54 = arith.constant 0.000000e+00 : f32
      %83 = vector.broadcast %cst_54 : f32 to vector<1x16x8xf32>
      %c9 = arith.constant 9 : index
      %c1_55 = arith.constant 1 : index
      %c0_56 = arith.constant 0 : index
      %84 = vector.load %arg9[%c9, %c1_55, %c0_56] : memref<10x18x8xf32, #tpu.memory_space<vmem>>, vector<1x16x8xf32>
      tpu.vector_store %arg9[%c9, %c1_55, %c0_56], %83 {strides = array<i32>} : memref<10x18x8xf32, #tpu.memory_space<vmem>>, vector<1x16x8xf32>,
    } else {
    }
    %c0_17 = arith.constant 0 : index
    %c0_18 = arith.constant 0 : index
    %19 = vector.load %arg6[%c0_17, %c0_18] : memref<9x8xf32, #tpu.memory_space<vmem>>, vector<9x8xf32>
    %c0_19 = arith.constant 0 : index
    %c0_20 = arith.constant 0 : index
    %c0_21 = arith.constant 0 : index
    %20 = vector.load %arg2[%c0_19, %c0_20, %c0_21] : memref<1x1x8xf32, #tpu.memory_space<vmem>>, vector<1x1x8xf32>
    %21 = vector.shape_cast %20 : vector<1x1x8xf32> to vector<1x8xf32>
    %22 = vector.broadcast %21 : vector<1x8xf32> to vector<9x8xf32>
    %23 = arith.mulf %19, %22 : vector<9x8xf32>
    %c0_22 = arith.constant 0 : index
    %c0_23 = arith.constant 0 : index
    %c0_24 = arith.constant 0 : index
    %24 = vector.load %arg9[%c0_22, %c0_23, %c0_24] : memref<10x18x8xf32, #tpu.memory_space<vmem>>, vector<8x16x8xf32>
    %25 = vector.extract_strided_slice %23 {offsets = [0, 0], sizes = [1, 8], strides = [1, 1]} : vector<9x8xf32> to vector<1x8xf32>
    %26 = vector.shape_cast %25 : vector<1x8xf32> to vector<1x1x8xf32>
    %27 = vector.broadcast %26 : vector<1x1x8xf32> to vector<8x16x8xf32>
    %28 = arith.mulf %24, %27 : vector<8x16x8xf32>
    %c0_25 = arith.constant 0 : index
    %c1_26 = arith.constant 1 : index
    %c0_27 = arith.constant 0 : index
    %29 = vector.load %arg9[%c0_25, %c1_26, %c0_27] : memref<10x18x8xf32, #tpu.memory_space<vmem>>, vector<8x16x8xf32>
    %30 = vector.extract_strided_slice %23 {offsets = [1, 0], sizes = [1, 8], strides = [1, 1]} : vector<9x8xf32> to vector<1x8xf32>
    %31 = vector.shape_cast %30 : vector<1x8xf32> to vector<1x1x8xf32>
    %32 = vector.broadcast %31 : vector<1x1x8xf32> to vector<8x16x8xf32>
    %33 = arith.mulf %29, %32 : vector<8x16x8xf32>
    %34 = arith.addf %28, %33 : vector<8x16x8xf32>
    %c0_28 = arith.constant 0 : index
    %c2 = arith.constant 2 : index
    %c0_29 = arith.constant 0 : index
    %35 = vector.load %arg9[%c0_28, %c2, %c0_29] : memref<10x18x8xf32, #tpu.memory_space<vmem>>, vector<8x16x8xf32>
    %36 = vector.extract_strided_slice %23 {offsets = [2, 0], sizes = [1, 8], strides = [1, 1]} : vector<9x8xf32> to vector<1x8xf32>
    %37 = vector.shape_cast %36 : vector<1x8xf32> to vector<1x1x8xf32>
    %38 = vector.broadcast %37 : vector<1x1x8xf32> to vector<8x16x8xf32>
    %39 = arith.mulf %35, %38 : vector<8x16x8xf32>
    %40 = arith.addf %34, %39 : vector<8x16x8xf32>
    %c1_30 = arith.constant 1 : index
    %c0_31 = arith.constant 0 : index
    %c0_32 = arith.constant 0 : index
    %41 = vector.load %arg9[%c1_30, %c0_31, %c0_32] : memref<10x18x8xf32, #tpu.memory_space<vmem>>, vector<8x16x8xf32>
    %42 = vector.extract_strided_slice %23 {offsets = [3, 0], sizes = [1, 8], strides = [1, 1]} : vector<9x8xf32> to vector<1x8xf32>
    %43 = vector.shape_cast %42 : vector<1x8xf32> to vector<1x1x8xf32>
    %44 = vector.broadcast %43 : vector<1x1x8xf32> to vector<8x16x8xf32>
    %45 = arith.mulf %41, %44 : vector<8x16x8xf32>
    %46 = arith.addf %40, %45 : vector<8x16x8xf32>
    %c1_33 = arith.constant 1 : index
    %c1_34 = arith.constant 1 : index
    %c0_35 = arith.constant 0 : index
    %47 = vector.load %arg9[%c1_33, %c1_34, %c0_35] : memref<10x18x8xf32, #tpu.memory_space<vmem>>, vector<8x16x8xf32>
    %48 = vector.extract_strided_slice %23 {offsets = [4, 0], sizes = [1, 8], strides = [1, 1]} : vector<9x8xf32> to vector<1x8xf32>
    %49 = vector.shape_cast %48 : vector<1x8xf32> to vector<1x1x8xf32>
    %50 = vector.broadcast %49 : vector<1x1x8xf32> to vector<8x16x8xf32>
    %51 = arith.mulf %47, %50 : vector<8x16x8xf32>
    %52 = arith.addf %46, %51 : vector<8x16x8xf32>
    %c1_36 = arith.constant 1 : index
    %c2_37 = arith.constant 2 : index
    %c0_38 = arith.constant 0 : index
    %53 = vector.load %arg9[%c1_36, %c2_37, %c0_38] : memref<10x18x8xf32, #tpu.memory_space<vmem>>, vector<8x16x8xf32>
    %54 = vector.extract_strided_slice %23 {offsets = [5, 0], sizes = [1, 8], strides = [1, 1]} : vector<9x8xf32> to vector<1x8xf32>
    %55 = vector.shape_cast %54 : vector<1x8xf32> to vector<1x1x8xf32>
    %56 = vector.broadcast %55 : vector<1x1x8xf32> to vector<8x16x8xf32>
    %57 = arith.mulf %53, %56 : vector<8x16x8xf32>
    %58 = arith.addf %52, %57 : vector<8x16x8xf32>
    %c2_39 = arith.constant 2 : index
    %c0_40 = arith.constant 0 : index
    %c0_41 = arith.constant 0 : index
    %59 = vector.load %arg9[%c2_39, %c0_40, %c0_41] : memref<10x18x8xf32, #tpu.memory_space<vmem>>, vector<8x16x8xf32>
    %60 = vector.extract_strided_slice %23 {offsets = [6, 0], sizes = [1, 8], strides = [1, 1]} : vector<9x8xf32> to vector<1x8xf32>
    %61 = vector.shape_cast %60 : vector<1x8xf32> to vector<1x1x8xf32>
    %62 = vector.broadcast %61 : vector<1x1x8xf32> to vector<8x16x8xf32>
    %63 = arith.mulf %59, %62 : vector<8x16x8xf32>
    %64 = arith.addf %58, %63 : vector<8x16x8xf32>
    %c2_42 = arith.constant 2 : index
    %c1_43 = arith.constant 1 : index
    %c0_44 = arith.constant 0 : index
    %65 = vector.load %arg9[%c2_42, %c1_43, %c0_44] : memref<10x18x8xf32, #tpu.memory_space<vmem>>, vector<8x16x8xf32>
    %66 = vector.extract_strided_slice %23 {offsets = [7, 0], sizes = [1, 8], strides = [1, 1]} : vector<9x8xf32> to vector<1x8xf32>
    %67 = vector.shape_cast %66 : vector<1x8xf32> to vector<1x1x8xf32>
    %68 = vector.broadcast %67 : vector<1x1x8xf32> to vector<8x16x8xf32>
    %69 = arith.mulf %65, %68 : vector<8x16x8xf32>
    %70 = arith.addf %64, %69 : vector<8x16x8xf32>
    %c2_45 = arith.constant 2 : index
    %c2_46 = arith.constant 2 : index
    %c0_47 = arith.constant 0 : index
    %71 = vector.load %arg9[%c2_45, %c2_46, %c0_47] : memref<10x18x8xf32, #tpu.memory_space<vmem>>, vector<8x16x8xf32>
    %72 = vector.extract_strided_slice %23 {offsets = [8, 0], sizes = [1, 8], strides = [1, 1]} : vector<9x8xf32> to vector<1x8xf32>
    %73 = vector.shape_cast %72 : vector<1x8xf32> to vector<1x1x8xf32>
    %74 = vector.broadcast %73 : vector<1x1x8xf32> to vector<8x16x8xf32>
    %75 = arith.mulf %71, %74 : vector<8x16x8xf32>
    %76 = arith.addf %70, %75 : vector<8x16x8xf32>
    %77 = vector.shape_cast %76 : vector<8x16x8xf32> to vector<128x8xf32>
    %c0_48 = arith.constant 0 : index
    %c0_49 = arith.constant 0 : index
    %78 = vector.load %arg7[%c0_48, %c0_49] : memref<8x16xf32, #tpu.memory_space<vmem>>, vector<8x16xf32>
    %cst_50 = arith.constant dense<0.000000e+00> : vector<128x16xf32>
    %79 = tpu.matmul %77, %78, %cst_50 {dimension_numbers = #tpu.dot_dimension_numbers<[1], [0], [0], [1], [0, 0, 1, 1], [], []>} : vector<128x8xf32>, vector<8x16xf32>, vector<128x16xf32> -> vector<128x16xf32>
    %c0_51 = arith.constant 0 : index
    %c0_52 = arith.constant 0 : index
    %c0_53 = arith.constant 0 : index
    %80 = vector.load %arg8[%c0_51, %c0_52, %c0_53] : memref<1x128x16xf32, #tpu.memory_space<vmem>>, vector<1x128x16xf32>
    %81 = vector.shape_cast %80 : vector<1x128x16xf32> to vector<128x16xf32>
    %82 = vector.shape_cast %79 : vector<128x16xf32> to vector<1x128x16xf32>
    tpu.vector_store %arg8[%c0_51, %c0_52, %c0_53], %82 {strides = array<i32>} : memref<1x128x16xf32, #tpu.memory_space<vmem>>, vector<1x128x16xf32>,
    return
  }
  func.func @transform_0(%arg0: i32, %arg1: i32) -> (i32, i32, i32) {
    %c0_i32 = arith.constant 0 : i32
    %c0_i32_0 = arith.constant 0 : i32
    %c0_i32_1 = arith.constant 0 : i32
    return %arg0, %c0_i32, %c0_i32_0 : i32, i32, i32
  }
  func.func @transform_1(%arg0: i32, %arg1: i32) -> (i32, i32, i32, i32) {
    %c0_i32 = arith.constant 0 : i32
    %c0_i32_0 = arith.constant 0 : i32
    %c0_i32_1 = arith.constant 0 : i32
    return %arg0, %arg1, %c0_i32, %c0_i32_0 : i32, i32, i32, i32
  }
  func.func @transform_2(%arg0: i32, %arg1: i32) -> (i32, i32, i32, i32) {
    %c8_i32 = arith.constant 8 : i32
    %0 = arith.muli %arg1, %c8_i32 : i32
    %c1_i32 = arith.constant 1 : i32
    %1 = arith.subi %0, %c1_i32 : i32
    %c0_i32 = arith.constant 0 : i32
    %2 = arith.maxsi %1, %c0_i32 : i32
    %c0_i32_0 = arith.constant 0 : i32
    %c0_i32_1 = arith.constant 0 : i32
    %c0_i32_2 = arith.constant 0 : i32
    return %arg0, %2, %c0_i32_0, %c0_i32_1 : i32, i32, i32, i32
  }
  func.func @transform_3(%arg0: i32, %arg1: i32) -> (i32, i32, i32, i32) {
    %c8_i32 = arith.constant 8 : i32
    %0 = arith.muli %arg1, %c8_i32 : i32
    %c8_i32_0 = arith.constant 8 : i32
    %1 = arith.addi %0, %c8_i32_0 : i32
    %c15_i32 = arith.constant 15 : i32
    %2 = arith.minsi %1, %c15_i32 : i32
    %c0_i32 = arith.constant 0 : i32
    %c0_i32_1 = arith.constant 0 : i32
    %c0_i32_2 = arith.constant 0 : i32
    return %arg0, %2, %c0_i32, %c0_i32_1 : i32, i32, i32, i32
  }
  func.func @transform_4(%arg0: i32, %arg1: i32) -> (i32, i32) {
    %c0_i32 = arith.constant 0 : i32
    %c0_i32_0 = arith.constant 0 : i32
    %c0_i32_1 = arith.constant 0 : i32
    return %c0_i32, %c0_i32_0 : i32, i32
  }
  func.func @transform_5(%arg0: i32, %arg1: i32) -> (i32, i32) {
    %c0_i32 = arith.constant 0 : i32
    %c0_i32_0 = arith.constant 0 : i32
    %c0_i32_1 = arith.constant 0 : i32
    return %c0_i32, %c0_i32_0 : i32, i32
  }
  func.func @transform_6(%arg0: i32, %arg1: i32) -> (i32, i32, i32) {
    %c0_i32 = arith.constant 0 : i32
    %c0_i32_0 = arith.constant 0 : i32
    return %arg0, %arg1, %c0_i32 : i32, i32, i32
  }
}

</mosaic_0001>

<llo_original>
// kernel: tpu_custom_call.1
$region0: #{tpu_custom_call.1}
  #allocation0 [shape = 'u32[]', space=smem, size = 0x4, offset = 0x4, fixed_abs, tag = 'smem constant byte address 0x4 - core index']
  #allocation1 [shape = 'u32[72,128]{1,0:T(1,128)}', space=vmem, size = 0x9000, scoped, tag = 'internal scratch']
  #allocation2 [shape = 'f32[10,18,8]{2,1,0:T(8,128)}', space=vmem, size = 0x1e000, scoped, tag = 'scratch operand']
  %s0 = inlined_call_operand.vmem [shape: f32[2,1,8], index: 0, kind: input, shape index: {}]
  %s1 = inlined_call_operand.vmem [shape: f32[2,16,16,8], index: 1, kind: input, shape index: {}]
  %s2 = inlined_call_operand.vmem [shape: f32[2,16,16,8], index: 2, kind: input, shape index: {}]
  %s3 = inlined_call_operand.vmem [shape: f32[2,16,16,8], index: 3, kind: input, shape index: {}]
  %s4 = inlined_call_operand.vmem [shape: f32[9,8], index: 4, kind: input, shape index: {}]
  %s5 = inlined_call_operand.vmem [shape: f32[8,16], index: 5, kind: input, shape index: {}]
  %s6 = inlined_call_operand.vmem [shape: f32[2,256,16], index: 6, kind: output, shape index: {}]
  %s7 = sld [smem:[#allocation0]]
  $region73: #{tpu_custom_call.1} parent=0
    _
  %s9 = ssub.s32 1, %s7
  %s10 = scalar_select 0, %s9, %s7
  loop: start=0, step=1, limit=6
  $region2: #{tpu_custom_call.1} parent=0 // loop_pre_header
    _
  $region3: #{tpu_custom_call.1} parent=0 // loop_header
    %s12 = sphi 0, %s16
    %p13 = scmp.ge.s32.totalorder %s12, 6
    %s19 = sphi 0, %s31
    %s20 = sphi 0, %s27
    %s21 = sphi 0, %s19
    %s22 = sphi 0, %s20
    %s23 = sphi 0, %s21
    %s24 = sphi 0, %s22
    %s34 = sphi 0, %s36
    %s37 = sphi 0, %s34
    %s38 = sphi 0, %s37
    %s54 = sphi 0, %s38
    %s62 = sphi 0, %s64
    %s65 = sphi 0, %s62
    %s66 = sphi 0, %s65
    %s82 = sphi 0, %s66
    %s98 = sphi 0, %s100
    %s101 = sphi 0, %s98
    %s102 = sphi 0, %s101
    %s118 = sphi 0, %s102
    %s134 = sphi 0, %s136
    %s137 = sphi 0, %s134
    %s138 = sphi 0, %s137
    %s154 = sphi 0, %s138
    %s158 = sphi 0, %s158
    %s160 = sphi 0, %s158
    %s161 = sphi 0, %s160
    %s175 = sphi 0, %s161
    %s179 = sphi 0, %s179
    %s181 = sphi 0, %s179
    %s182 = sphi 0, %s181
    %s196 = sphi 0, %s182
    %s204 = sphi 0, %s206
    %s207 = sphi 0, %s204
    %s208 = sphi 0, %s207
    %s224 = sphi 0, %s208
  $region4: #{tpu_custom_call.1} parent=0 // loop_header_branch
    %15 = sbr.rel (%p13) target = $region8
  $region5: #{tpu_custom_call.1} parent=0 // loop_body
    %s17 = ssub.s32 %s12, 1
    %s18 = ssub.s32 %s12, 2
    %s25 = sadd.s32 1, %s20
    %p26 = scmp.ge.s32.totalorder %s25, 2
    %s27 = scalar_select %p26, 0, %s25
    %s28 = sadd.s32 1, %s19
    %s29 = scalar_select %p26, %s28, %s19
    %p30 = scmp.ge.s32.totalorder %s29, 2
    %s31 = scalar_select %p30, 0, %s29
    %s32 = ssub.s32 %s19, %s31
    %p33 = scmp.eq.s32.totalorder %s32, 0
    %s35 = sadd.s32 %s34, 1
    %s36 = scalar_select %p33, %s34, %s35
    %p39 = pneg %p33
    %p40 = scmp.eq.s32.totalorder %s12, 3
    %p41 = por %p39, %p40
    %p42 = scmp.ne.s32.totalorder %s34, %s37
    %p43 = scmp.eq.s32.totalorder %s12, 0
    %p44 = por %p42, %p43
    %p45 = scmp.ne.s32.totalorder %s34, %s37
    %p46 = scmp.eq.s32.totalorder %s17, 3
    %p47 = por %p45, %p46
    %p48 = scmp.ne.s32.totalorder %s37, %s38
    %p49 = scmp.eq.s32.totalorder %s17, 0
    %p50 = por %p48, %p49
    %p51 = scmp.ne.s32.totalorder %s37, %s38
    %p52 = scmp.eq.s32.totalorder %s18, 3
    %p53 = por %p51, %p52
    %p55 = scmp.ne.s32.totalorder %s38, %s54
    %p56 = scmp.eq.s32.totalorder %s18, 0
    %p57 = por %p55, %p56
    %s58 = ssub.s32 %s19, %s31
    %s59 = ssub.s32 %s20, %s27
    %s60 = sor.u32 %s58, %s59
    %p61 = scmp.eq.s32.totalorder %s60, 0
    %s63 = sadd.s32 %s62, 1
    %s64 = scalar_select %p61, %s62, %s63
    %p67 = pneg %p61
    %p68 = scmp.eq.s32.totalorder %s12, 3
    %p69 = por %p67, %p68
    %p70 = scmp.ne.s32.totalorder %s62, %s65
    %p71 = scmp.eq.s32.totalorder %s12, 0
    %p72 = por %p70, %p71
    %p73 = scmp.ne.s32.totalorder %s62, %s65
    %p74 = scmp.eq.s32.totalorder %s17, 3
    %p75 = por %p73, %p74
    %p76 = scmp.ne.s32.totalorder %s65, %s66
    %p77 = scmp.eq.s32.totalorder %s17, 0
    %p78 = por %p76, %p77
    %p79 = scmp.ne.s32.totalorder %s65, %s66
    %p80 = scmp.eq.s32.totalorder %s18, 3
    %p81 = por %p79, %p80
    %p83 = scmp.ne.s32.totalorder %s66, %s82
    %p84 = scmp.eq.s32.totalorder %s18, 0
    %p85 = por %p83, %p84
    %s86 = smul.u32 %s20, 8
    %s87 = ssub.s32 %s86, 1
    %p88 = scmp.gt.s32.totalorder %s87, 0
    %s89 = scalar_select %p88, %s87, 0
    %s90 = smul.u32 %s27, 8
    %s91 = ssub.s32 %s90, 1
    %p92 = scmp.gt.s32.totalorder %s91, 0
    %s93 = scalar_select %p92, %s91, 0
    %s94 = ssub.s32 %s19, %s31
    %s95 = ssub.s32 %s89, %s93
    %s96 = sor.u32 %s94, %s95
    %p97 = scmp.eq.s32.totalorder %s96, 0
    %s99 = sadd.s32 %s98, 1
    %s100 = scalar_select %p97, %s98, %s99
    %p103 = pneg %p97
    %p104 = scmp.eq.s32.totalorder %s12, 3
    %p105 = por %p103, %p104
    %p106 = scmp.ne.s32.totalorder %s98, %s101
    %p107 = scmp.eq.s32.totalorder %s12, 0
    %p108 = por %p106, %p107
    %p109 = scmp.ne.s32.totalorder %s98, %s101
    %p110 = scmp.eq.s32.totalorder %s17, 3
    %p111 = por %p109, %p110
    %p112 = scmp.ne.s32.totalorder %s101, %s102
    %p113 = scmp.eq.s32.totalorder %s17, 0
    %p114 = por %p112, %p113
    %p115 = scmp.ne.s32.totalorder %s101, %s102
    %p116 = scmp.eq.s32.totalorder %s18, 3
    %p117 = por %p115, %p116
    %p119 = scmp.ne.s32.totalorder %s102, %s118
    %p120 = scmp.eq.s32.totalorder %s18, 0
    %p121 = por %p119, %p120
    %s122 = smul.u32 %s20, 8
    %s123 = sadd.s32 %s122, 8
    %p124 = scmp.lt.s32.totalorder %s123, 15
    %s125 = scalar_select %p124, %s123, 15
    %s126 = smul.u32 %s27, 8
    %s127 = sadd.s32 %s126, 8
    %p128 = scmp.lt.s32.totalorder %s127, 15
    %s129 = scalar_select %p128, %s127, 15
    %s130 = ssub.s32 %s19, %s31
    %s131 = ssub.s32 %s125, %s129
    %s132 = sor.u32 %s130, %s131
    %p133 = scmp.eq.s32.totalorder %s132, 0
    %s135 = sadd.s32 %s134, 1
    %s136 = scalar_select %p133, %s134, %s135
    %p139 = pneg %p133
    %p140 = scmp.eq.s32.totalorder %s12, 3
    %p141 = por %p139, %p140
    %p142 = scmp.ne.s32.totalorder %s134, %s137
    %p143 = scmp.eq.s32.totalorder %s12, 0
    %p144 = por %p142, %p143
    %p145 = scmp.ne.s32.totalorder %s134, %s137
    %p146 = scmp.eq.s32.totalorder %s17, 3
    %p147 = por %p145, %p146
    %p148 = scmp.ne.s32.totalorder %s137, %s138
    %p149 = scmp.eq.s32.totalorder %s17, 0
    %p150 = por %p148, %p149
    %p151 = scmp.ne.s32.totalorder %s137, %s138
    %p152 = scmp.eq.s32.totalorder %s18, 3
    %p153 = por %p151, %p152
    %p155 = scmp.ne.s32.totalorder %s138, %s154
    %p156 = scmp.eq.s32.totalorder %s18, 0
    %p157 = por %p155, %p156
    %s159 = sadd.s32 %s158, 1
    %p162 = scmp.eq.s32.totalorder %s12, 3
    %p163 = scmp.ne.s32.totalorder %s158, %s160
    %p164 = scmp.eq.s32.totalorder %s12, 0
    %p165 = por %p163, %p164
    %p166 = scmp.ne.s32.totalorder %s158, %s160
    %p167 = scmp.eq.s32.totalorder %s17, 3
    %p168 = por %p166, %p167
    %p169 = scmp.ne.s32.totalorder %s160, %s161
    %p170 = scmp.eq.s32.totalorder %s17, 0
    %p171 = por %p169, %p170
    %p172 = scmp.ne.s32.totalorder %s160, %s161
    %p173 = scmp.eq.s32.totalorder %s18, 3
    %p174 = por %p172, %p173
    %p176 = scmp.ne.s32.totalorder %s161, %s175
    %p177 = scmp.eq.s32.totalorder %s18, 0
    %p178 = por %p176, %p177
    %s180 = sadd.s32 %s179, 1
    %p183 = scmp.eq.s32.totalorder %s12, 3
    %p184 = scmp.ne.s32.totalorder %s179, %s181
    %p185 = scmp.eq.s32.totalorder %s12, 0
    %p186 = por %p184, %p185
    %p187 = scmp.ne.s32.totalorder %s179, %s181
    %p188 = scmp.eq.s32.totalorder %s17, 3
    %p189 = por %p187, %p188
    %p190 = scmp.ne.s32.totalorder %s181, %s182
    %p191 = scmp.eq.s32.totalorder %s17, 0
    %p192 = por %p190, %p191
    %p193 = scmp.ne.s32.totalorder %s181, %s182
    %p194 = scmp.eq.s32.totalorder %s18, 3
    %p195 = por %p193, %p194
    %p197 = scmp.ne.s32.totalorder %s182, %s196
    %p198 = scmp.eq.s32.totalorder %s18, 0
    %p199 = por %p197, %p198
    %s200 = ssub.s32 %s19, %s31
    %s201 = ssub.s32 %s20, %s27
    %s202 = sor.u32 %s200, %s201
    %p203 = scmp.eq.s32.totalorder %s202, 0
    %s205 = sadd.s32 %s204, 1
    %s206 = scalar_select %p203, %s204, %s205
    %p209 = pneg %p203
    %p210 = scmp.eq.s32.totalorder %s12, 3
    %p211 = por %p209, %p210
    %p212 = scmp.ne.s32.totalorder %s204, %s207
    %p213 = scmp.eq.s32.totalorder %s12, 0
    %p214 = por %p212, %p213
    %p215 = scmp.ne.s32.totalorder %s204, %s207
    %p216 = scmp.eq.s32.totalorder %s17, 3
    %p217 = por %p215, %p216
    %p218 = scmp.ne.s32.totalorder %s207, %s208
    %p219 = scmp.eq.s32.totalorder %s17, 0
    %p220 = por %p218, %p219
    %p221 = scmp.ne.s32.totalorder %s207, %s208
    %p222 = scmp.eq.s32.totalorder %s18, 3
    %p223 = por %p221, %p222
    %p225 = scmp.ne.s32.totalorder %s208, %s224
    %p226 = scmp.eq.s32.totalorder %s18, 0
    %p227 = por %p225, %p226
    %p228 = scmp.le.s32.totalorder 1, %s12
    %p229 = scmp.lt.s32.totalorder %s12, 5
    %p230 = pnand %p228, %p229
    %p231 = pneg %p230
    // Predicated region
    $region9: #{tpu_custom_call.1} parent=5 // pred_check
      _
    $region10: #{tpu_custom_call.1} parent=5 // pred_check_branch
      %233 = sbr.rel (%p230) target = $region12
    $region11: #{tpu_custom_call.1} parent=5 // pred_region
      %s234 = ssub.s32 %s12, 1
      // Predicated region
      $region13: #{tpu_custom_call.1} parent=11 // pred_check
        %p235 = pneg %p171
      $region14: #{tpu_custom_call.1} parent=11 // pred_check_branch
        %237 = sbr.rel (%p235) target = $region16
      $region15: #{tpu_custom_call.1} parent=11 // pred_region
        _
      $region16: #{tpu_custom_call.1} parent=11 // pred_fallthru
        _
      // Predicated region
      $region17: #{tpu_custom_call.1} parent=11 // pred_check
        %p238 = pneg %p192
      $region18: #{tpu_custom_call.1} parent=11 // pred_check_branch
        %240 = sbr.rel (%p238) target = $region20
      $region19: #{tpu_custom_call.1} parent=11 // pred_region
        _
      $region20: #{tpu_custom_call.1} parent=11 // pred_fallthru
        _
    $region12: #{tpu_custom_call.1} parent=5 // pred_fallthru
      _
    %p241 = scmp.lt.s32.totalorder %s12, 4
    // Predicated region
    $region21: #{tpu_custom_call.1} parent=5 // pred_check
      %p242 = pneg %p241
    $region22: #{tpu_custom_call.1} parent=5 // pred_check_branch
      %244 = sbr.rel (%p242) target = $region24
    $region23: #{tpu_custom_call.1} parent=5 // pred_region
      // Predicated region
      $region25: #{tpu_custom_call.1} parent=23 // pred_check
        %p245 = pneg %p44
      $region26: #{tpu_custom_call.1} parent=23 // pred_check_branch
        %247 = sbr.rel (%p245) target = $region28
      $region27: #{tpu_custom_call.1} parent=23 // pred_region
        %p248 = scmp.lt.s32.totalorder %s19, 1
        %s249 = scalar_select %p248, %s19, 1
        %s250 = scalar_lea.vmem %s0, %s249
      $region28: #{tpu_custom_call.1} parent=23 // pred_fallthru
        _
      // Predicated region
      $region29: #{tpu_custom_call.1} parent=23 // pred_check
        %p251 = pneg %p72
      $region30: #{tpu_custom_call.1} parent=23 // pred_check_branch
        %253 = sbr.rel (%p251) target = $region32
      $region31: #{tpu_custom_call.1} parent=23 // pred_region
        %s254 = smul.u32 8, %s20
        %p255 = scmp.lt.s32.totalorder %s19, 1
        %s256 = scalar_select %p255, %s19, 1
        %p257 = scmp.lt.s32.totalorder %s254, 15
        %s258 = scalar_select %p257, %s254, 15
        %s259 = smul.addr %s258, 2
        %s260 = smul.addr %s256, 32
        %s261 = sadd.s32 %s259, %s260
        %s262 = smul.addr %s261, 8
        %s263 = scalar_lea.vmem %s1, %s262
        %s264 = smul.u32 8, %s20
      $region32: #{tpu_custom_call.1} parent=23 // pred_fallthru
        _
      // Predicated region
      $region33: #{tpu_custom_call.1} parent=23 // pred_check
        %p265 = pneg %p108
      $region34: #{tpu_custom_call.1} parent=23 // pred_check_branch
        %267 = sbr.rel (%p265) target = $region36
      $region35: #{tpu_custom_call.1} parent=23 // pred_region
        %s268 = smul.u32 %s20, 8
        %s269 = ssub.s32 %s268, 1
        %p270 = scmp.gt.s32.totalorder %s269, 0
        %s271 = scalar_select %p270, %s269, 0
        %p272 = scmp.lt.s32.totalorder %s19, 1
        %s273 = scalar_select %p272, %s19, 1
        %p274 = scmp.lt.s32.totalorder %s271, 15
        %s275 = scalar_select %p274, %s271, 15
        %s276 = smul.addr %s275, 2
        %s277 = smul.addr %s273, 32
        %s278 = sadd.s32 %s276, %s277
        %s279 = smul.addr %s278, 8
        %s280 = scalar_lea.vmem %s2, %s279
        %s281 = smul.u32 %s20, 8
        %s282 = ssub.s32 %s281, 1
        %p283 = scmp.gt.s32.totalorder %s282, 0
        %s284 = scalar_select %p283, %s282, 0
      $region36: #{tpu_custom_call.1} parent=23 // pred_fallthru
        _
      // Predicated region
      $region37: #{tpu_custom_call.1} parent=23 // pred_check
        %p285 = pneg %p144
      $region38: #{tpu_custom_call.1} parent=23 // pred_check_branch
        %287 = sbr.rel (%p285) target = $region40
      $region39: #{tpu_custom_call.1} parent=23 // pred_region
        %s288 = smul.u32 %s20, 8
        %s289 = sadd.s32 %s288, 8
        %p290 = scmp.lt.s32.totalorder %s289, 15
        %s291 = scalar_select %p290, %s289, 15
        %p292 = scmp.lt.s32.totalorder %s19, 1
        %s293 = scalar_select %p292, %s19, 1
        %p294 = scmp.lt.s32.totalorder %s291, 15
        %s295 = scalar_select %p294, %s291, 15
        %s296 = smul.addr %s295, 2
        %s297 = smul.addr %s293, 32
        %s298 = sadd.s32 %s296, %s297
        %s299 = smul.addr %s298, 8
        %s300 = scalar_lea.vmem %s3, %s299
        %s301 = smul.u32 %s20, 8
        %s302 = sadd.s32 %s301, 8
        %p303 = scmp.lt.s32.totalorder %s302, 15
        %s304 = scalar_select %p303, %s302, 15
      $region40: #{tpu_custom_call.1} parent=23 // pred_fallthru
        _
    $region24: #{tpu_custom_call.1} parent=5 // pred_fallthru
      _
    %p305 = scmp.le.s32.totalorder 1, %s12
    %p306 = scmp.lt.s32.totalorder %s12, 5
    %p307 = pnand %p305, %p306
    %p308 = pneg %p307
    // Predicated region
    $region41: #{tpu_custom_call.1} parent=5 // pred_check
      _
    $region42: #{tpu_custom_call.1} parent=5 // pred_check_branch
      %310 = sbr.rel (%p307) target = $region44
    $region43: #{tpu_custom_call.1} parent=5 // pred_region
      %s311 = ssub.s32 %s12, 1
      %p312 = scmp.lt.s32.totalorder %s21, 1
      %s313 = scalar_select %p312, %s21, 1
      %s314 = scalar_lea.vmem %s0, %s313
      %p315 = pneg %p50
      %p316 = pneg %p47
      %s317 = smul.u32 8, %s22
      %p318 = scmp.lt.s32.totalorder %s21, 1
      %s319 = scalar_select %p318, %s21, 1
      %p320 = scmp.lt.s32.totalorder %s317, 15
      %s321 = scalar_select %p320, %s317, 15
      %s322 = smul.addr %s321, 2
      %s323 = smul.addr %s319, 32
      %s324 = sadd.s32 %s322, %s323
      %s325 = smul.addr %s324, 8
      %s326 = scalar_lea.vmem %s1, %s325
      %p327 = pneg %p78
      %p328 = pneg %p75
      %s329 = smul.u32 %s22, 8
      %s330 = ssub.s32 %s329, 1
      %p331 = scmp.gt.s32.totalorder %s330, 0
      %s332 = scalar_select %p331, %s330, 0
      %p333 = scmp.lt.s32.totalorder %s21, 1
      %s334 = scalar_select %p333, %s21, 1
      %p335 = scmp.lt.s32.totalorder %s332, 15
      %s336 = scalar_select %p335, %s332, 15
      %s337 = smul.addr %s336, 2
      %s338 = smul.addr %s334, 32
      %s339 = sadd.s32 %s337, %s338
      %s340 = smul.addr %s339, 8
      %s341 = scalar_lea.vmem %s2, %s340
      %p342 = pneg %p114
      %p343 = pneg %p111
      %s344 = smul.u32 %s22, 8
      %s345 = sadd.s32 %s344, 8
      %p346 = scmp.lt.s32.totalorder %s345, 15
      %s347 = scalar_select %p346, %s345, 15
      %p348 = scmp.lt.s32.totalorder %s21, 1
      %s349 = scalar_select %p348, %s21, 1
      %p350 = scmp.lt.s32.totalorder %s347, 15
      %s351 = scalar_select %p350, %s347, 15
      %s352 = smul.addr %s351, 2
      %s353 = smul.addr %s349, 32
      %s354 = sadd.s32 %s352, %s353
      %s355 = smul.addr %s354, 8
      %s356 = scalar_lea.vmem %s3, %s355
      %p357 = pneg %p150
      %p358 = pneg %p147
      %p359 = pneg %p171
      %p360 = pneg %p168
      %p361 = pneg %p192
      %p362 = pneg %p189
      %p363 = pneg %p220
      %p364 = pneg %p217
      %s365 = smul.u32 16, %s22
      %p366 = scmp.lt.s32.totalorder %s21, 1
      %s367 = scalar_select %p366, %s21, 1
      %p368 = scmp.lt.s32.totalorder %s365, 31
      %s369 = scalar_select %p368, %s365, 31
      %s370 = smul.addr %s367, 32
      %s371 = sadd.s32 %s369, %s370
      %s372 = smul.addr %s371, 8
      %s373 = scalar_lea.vmem %s6, %s372
      %p374 = scmp.lt.s32.totalorder %s21, 1
      %s375 = scalar_select %p374, %s21, 1
      %s376 = scalar_lea.vmem %s0, %s375
      %s377 = smul.u32 8, %s22
      %p378 = scmp.lt.s32.totalorder %s21, 1
      %s379 = scalar_select %p378, %s21, 1
      %p380 = scmp.lt.s32.totalorder %s377, 15
      %s381 = scalar_select %p380, %s377, 15
      %s382 = smul.addr %s381, 2
      %s383 = smul.addr %s379, 32
      %s384 = sadd.s32 %s382, %s383
      %s385 = smul.addr %s384, 8
      %s386 = scalar_lea.vmem %s1, %s385
      %s387 = smul.u32 8, %s22
      %s388 = smul.u32 %s22, 8
      %s389 = ssub.s32 %s388, 1
      %p390 = scmp.gt.s32.totalorder %s389, 0
      %s391 = scalar_select %p390, %s389, 0
      %p392 = scmp.lt.s32.totalorder %s21, 1
      %s393 = scalar_select %p392, %s21, 1
      %p394 = scmp.lt.s32.totalorder %s391, 15
      %s395 = scalar_select %p394, %s391, 15
      %s396 = smul.addr %s395, 2
      %s397 = smul.addr %s393, 32
      %s398 = sadd.s32 %s396, %s397
      %s399 = smul.addr %s398, 8
      %s400 = scalar_lea.vmem %s2, %s399
      %s401 = smul.u32 %s22, 8
      %s402 = ssub.s32 %s401, 1
      %p403 = scmp.gt.s32.totalorder %s402, 0
      %s404 = scalar_select %p403, %s402, 0
      %s405 = smul.u32 %s22, 8
      %s406 = sadd.s32 %s405, 8
      %p407 = scmp.lt.s32.totalorder %s406, 15
      %s408 = scalar_select %p407, %s406, 15
      %p409 = scmp.lt.s32.totalorder %s21, 1
      %s410 = scalar_select %p409, %s21, 1
      %p411 = scmp.lt.s32.totalorder %s408, 15
      %s412 = scalar_select %p411, %s408, 15
      %s413 = smul.addr %s412, 2
      %s414 = smul.addr %s410, 32
      %s415 = sadd.s32 %s413, %s414
      %s416 = smul.addr %s415, 8
      %s417 = scalar_lea.vmem %s3, %s416
      %s418 = smul.u32 %s22, 8
      %s419 = sadd.s32 %s418, 8
      %p420 = scmp.lt.s32.totalorder %s419, 15
      %s421 = scalar_select %p420, %s419, 15
      %s422 = smul.u32 16, %s22
      %p423 = scmp.lt.s32.totalorder %s21, 1
      %s424 = scalar_select %p423, %s21, 1
      %p425 = scmp.lt.s32.totalorder %s422, 31
      %s426 = scalar_select %p425, %s422, 31
      %s427 = smul.addr %s424, 32
      %s428 = sadd.s32 %s426, %s427
      %s429 = smul.addr %s428, 8
      %s430 = scalar_lea.vmem %s6, %s429
      %s431 = smul.u32 16, %s22
      %v432 = vld [vmem:[%s386] sm:$0xff]
      %v433 = vld [vmem:[%s386 + $0x8] sm:$0xff]
      %v434 = vld [vmem:[%s386 + $0x10] sm:$0xff]
      %v435 = vld [vmem:[%s386 + $0x18] sm:$0xff]
      %v436 = vld [vmem:[%s386 + $0x20] sm:$0xff]
      %v437 = vld [vmem:[%s386 + $0x28] sm:$0xff]
      %v438 = vld [vmem:[%s386 + $0x30] sm:$0xff]
      %v439 = vld [vmem:[%s386 + $0x38] sm:$0xff]
      %v440 = vld [vmem:[%s386 + $0x40] sm:$0xff]
      %v441 = vld [vmem:[%s386 + $0x48] sm:$0xff]
      %v442 = vld [vmem:[%s386 + $0x50] sm:$0xff]
      %v443 = vld [vmem:[%s386 + $0x58] sm:$0xff]
      %v444 = vld [vmem:[%s386 + $0x60] sm:$0xff]
      %v445 = vld [vmem:[%s386 + $0x68] sm:$0xff]
      %v446 = vld [vmem:[%s386 + $0x70] sm:$0xff]
      %v447 = vld [vmem:[%s386 + $0x78] sm:$0xff]
      %s448 = scalar_lea.vmem [#allocation2], 24
      %vm449 = vcmask 64512
      %450 = vst.msk [vmem:[%s448 + $0x1] sm:$0xff] %vm449, %v432
      %451 = vst.msk [vmem:[%s448 + $0x9] sm:$0xff] %vm449, %v433
      %452 = vst.msk [vmem:[%s448 + $0x19] sm:$0xff] %vm449, %v434
      %453 = vst.msk [vmem:[%s448 + $0x21] sm:$0xff] %vm449, %v435
      %454 = vst.msk [vmem:[%s448 + $0x31] sm:$0xff] %vm449, %v436
      %455 = vst.msk [vmem:[%s448 + $0x39] sm:$0xff] %vm449, %v437
      %456 = vst.msk [vmem:[%s448 + $0x49] sm:$0xff] %vm449, %v438
      %457 = vst.msk [vmem:[%s448 + $0x51] sm:$0xff] %vm449, %v439
      %458 = vst.msk [vmem:[%s448 + $0x61] sm:$0xff] %vm449, %v440
      %459 = vst.msk [vmem:[%s448 + $0x69] sm:$0xff] %vm449, %v441
      %460 = vst.msk [vmem:[%s448 + $0x79] sm:$0xff] %vm449, %v442
      %461 = vst.msk [vmem:[%s448 + $0x81] sm:$0xff] %vm449, %v443
      %462 = vst.msk [vmem:[%s448 + $0x91] sm:$0xff] %vm449, %v444
      %463 = vst.msk [vmem:[%s448 + $0x99] sm:$0xff] %vm449, %v445
      %464 = vst.msk [vmem:[%s448 + $0xa9] sm:$0xff] %vm449, %v446
      %465 = vst.msk [vmem:[%s448 + $0xb1] sm:$0xff] %vm449, %v447
      %vm466 = vcmask 57344
      %467 = vst.msk [vmem:[#allocation2] sm:$0x1] %vm466, 0.0
      %468 = vst.msk [vmem:[#allocation2 + $0x18] sm:$0x1] %vm466, 0.0
      %469 = vst.msk [vmem:[#allocation2 + $0x30] sm:$0x1] %vm466, 0.0
      %470 = vst.msk [vmem:[#allocation2 + $0x48] sm:$0x1] %vm466, 0.0
      %471 = vst.msk [vmem:[#allocation2 + $0x60] sm:$0x1] %vm466, 0.0
      %472 = vst.msk [vmem:[#allocation2 + $0x78] sm:$0x1] %vm466, 0.0
      %473 = vst.msk [vmem:[#allocation2 + $0x90] sm:$0x1] %vm466, 0.0
      %474 = vst.msk [vmem:[#allocation2 + $0xa8] sm:$0x1] %vm466, 0.0
      %475 = vst.msk [vmem:[#allocation2 + $0xc0] sm:$0x1] %vm466, 0.0
      %476 = vst.msk [vmem:[#allocation2 + $0xd8] sm:$0x1] %vm466, 0.0
      %477 = vst.msk [vmem:[#allocation2 + $0x11] sm:$0x1] %vm466, 0.0
      %478 = vst.msk [vmem:[#allocation2 + $0x29] sm:$0x1] %vm466, 0.0
      %479 = vst.msk [vmem:[#allocation2 + $0x41] sm:$0x1] %vm466, 0.0
      %480 = vst.msk [vmem:[#allocation2 + $0x59] sm:$0x1] %vm466, 0.0
      %481 = vst.msk [vmem:[#allocation2 + $0x71] sm:$0x1] %vm466, 0.0
      %482 = vst.msk [vmem:[#allocation2 + $0x89] sm:$0x1] %vm466, 0.0
      %483 = vst.msk [vmem:[#allocation2 + $0xa1] sm:$0x1] %vm466, 0.0
      %484 = vst.msk [vmem:[#allocation2 + $0xb9] sm:$0x1] %vm466, 0.0
      %485 = vst.msk [vmem:[#allocation2 + $0xd1] sm:$0x1] %vm466, 0.0
      %486 = vst.msk [vmem:[#allocation2 + $0xe9] sm:$0x1] %vm466, 0.0
      %p487 = scmp.gt.s32.totalorder %s22, 0
      // Predicated region
      $region45: #{tpu_custom_call.1} parent=43 // pred_check
        %p488 = pneg %p487
      $region46: #{tpu_custom_call.1} parent=43 // pred_check_branch
        %490 = sbr.rel (%p488) target = $region48
      $region47: #{tpu_custom_call.1} parent=43 // pred_region
        %v491 = vld [vmem:[%s400] sm:$0xff]
        %v492 = vld [vmem:[%s400 + $0x8] sm:$0xff]
        %493 = vst.msk [vmem:[#allocation2 + $0x1] sm:$0xff] %vm449, %v491
        %494 = vst.msk [vmem:[#allocation2 + $0x9] sm:$0xff] %vm449, %v492
      $region48: #{tpu_custom_call.1} parent=43 // pred_fallthru
        _
      %p495 = scmp.eq.s32.totalorder %s22, 0
      // Predicated region
      $region49: #{tpu_custom_call.1} parent=43 // pred_check
        %p496 = pneg %p495
      $region50: #{tpu_custom_call.1} parent=43 // pred_check_branch
        %498 = sbr.rel (%p496) target = $region52
      $region51: #{tpu_custom_call.1} parent=43 // pred_region
        %499 = vst.msk [vmem:[#allocation2 + $0x1] sm:$0xff] %vm449, 0.0
        %500 = vst.msk [vmem:[#allocation2 + $0x9] sm:$0xff] %vm449, 0.0
      $region52: #{tpu_custom_call.1} parent=43 // pred_fallthru
        _
      %p501 = scmp.lt.s32.totalorder %s22, 1
      // Predicated region
      $region53: #{tpu_custom_call.1} parent=43 // pred_check
        %p502 = pneg %p501
      $region54: #{tpu_custom_call.1} parent=43 // pred_check_branch
        %504 = sbr.rel (%p502) target = $region56
      $region55: #{tpu_custom_call.1} parent=43 // pred_region
        %v505 = vld [vmem:[%s417] sm:$0xff]
        %v506 = vld [vmem:[%s417 + $0x8] sm:$0xff]
        %s507 = scalar_lea.vmem [#allocation2], 216
        %508 = vst.msk [vmem:[%s507 + $0x1] sm:$0xff] %vm449, %v505
        %509 = vst.msk [vmem:[%s507 + $0x9] sm:$0xff] %vm449, %v506
      $region56: #{tpu_custom_call.1} parent=43 // pred_fallthru
        _
      %p510 = scmp.eq.s32.totalorder %s22, 1
      // Predicated region
      $region57: #{tpu_custom_call.1} parent=43 // pred_check
        %p511 = pneg %p510
      $region58: #{tpu_custom_call.1} parent=43 // pred_check_branch
        %513 = sbr.rel (%p511) target = $region60
      $region59: #{tpu_custom_call.1} parent=43 // pred_region
        %s514 = scalar_lea.vmem [#allocation2], 216
        %515 = vst.msk [vmem:[%s514 + $0x1] sm:$0xff] %vm449, 0.0
        %516 = vst.msk [vmem:[%s514 + $0x9] sm:$0xff] %vm449, 0.0
      $region60: #{tpu_custom_call.1} parent=43 // pred_fallthru
        _
      %v517 = vld [vmem:[%s4] sm:$0xff]
      %v518 = vld [vmem:[%s4 + $0x8] sm:$0x1]
      %v519 = vld [vmem:[%s376] sm:$0x1]
      %v521 = vperm.slane %v519, 0
      %v523 = vmul.f32 %v517, %v521
      %v524 = vmul.f32 %v518, %v521
      %v525 = vld [vmem:[#allocation2] sm:$0xff]
      %v526 = vld [vmem:[#allocation2 + $0x8] sm:$0xff]
      %v527 = vld [vmem:[#allocation2 + $0x18] sm:$0xff]
      %v528 = vld [vmem:[#allocation2 + $0x20] sm:$0xff]
      %v529 = vld [vmem:[#allocation2 + $0x30] sm:$0xff]
      %v530 = vld [vmem:[#allocation2 + $0x38] sm:$0xff]
      %v531 = vld [vmem:[#allocation2 + $0x48] sm:$0xff]
      %v532 = vld [vmem:[#allocation2 + $0x50] sm:$0xff]
      %v533 = vld [vmem:[#allocation2 + $0x60] sm:$0xff]
      %v534 = vld [vmem:[#allocation2 + $0x68] sm:$0xff]
      %v535 = vld [vmem:[#allocation2 + $0x78] sm:$0xff]
      %v536 = vld [vmem:[#allocation2 + $0x80] sm:$0xff]
      %v537 = vld [vmem:[#allocation2 + $0x90] sm:$0xff]
      %v538 = vld [vmem:[#allocation2 + $0x98] sm:$0xff]
      %v539 = vld [vmem:[#allocation2 + $0xa8] sm:$0xff]
      %v540 = vld [vmem:[#allocation2 + $0xb0] sm:$0xff]
      %v541 = vperm.slane %v523, 0
      %v542 = vmul.f32 %v525, %v541
      %v543 = vmul.f32 %v526, %v541
      %v544 = vmul.f32 %v527, %v541
      %v545 = vmul.f32 %v528, %v541
      %v546 = vmul.f32 %v529, %v541
      %v547 = vmul.f32 %v530, %v541
      %v548 = vmul.f32 %v531, %v541
      %v549 = vmul.f32 %v532, %v541
      %v550 = vmul.f32 %v533, %v541
      %v551 = vmul.f32 %v534, %v541
      %v552 = vmul.f32 %v535, %v541
      %v553 = vmul.f32 %v536, %v541
      %v554 = vmul.f32 %v537, %v541
      %v555 = vmul.f32 %v538, %v541
      %v556 = vmul.f32 %v539, %v541
      %v557 = vmul.f32 %v540, %v541
      %v558 = vld [vmem:[#allocation2 + $0x1] sm:$0xff]
      %v559 = vld [vmem:[#allocation2 + $0x9] sm:$0xff]
      %v560 = vld [vmem:[#allocation2 + $0x19] sm:$0xff]
      %v561 = vld [vmem:[#allocation2 + $0x21] sm:$0xff]
      %v562 = vld [vmem:[#allocation2 + $0x31] sm:$0xff]
      %v563 = vld [vmem:[#allocation2 + $0x39] sm:$0xff]
      %v564 = vld [vmem:[#allocation2 + $0x49] sm:$0xff]
      %v565 = vld [vmem:[#allocation2 + $0x51] sm:$0xff]
      %v566 = vld [vmem:[#allocation2 + $0x61] sm:$0xff]
      %v567 = vld [vmem:[#allocation2 + $0x69] sm:$0xff]
      %v568 = vld [vmem:[#allocation2 + $0x79] sm:$0xff]
      %v569 = vld [vmem:[#allocation2 + $0x81] sm:$0xff]
      %v570 = vld [vmem:[#allocation2 + $0x91] sm:$0xff]
      %v571 = vld [vmem:[#allocation2 + $0x99] sm:$0xff]
      %v572 = vld [vmem:[#allocation2 + $0xa9] sm:$0xff]
      %v573 = vld [vmem:[#allocation2 + $0xb1] sm:$0xff]
      %v574 = vperm.slane %v523, 1
      %v575 = vmul.f32 %v558, %v574
      %v576 = vmul.f32 %v559, %v574
      %v577 = vmul.f32 %v560, %v574
      %v578 = vmul.f32 %v561, %v574
      %v579 = vmul.f32 %v562, %v574
      %v580 = vmul.f32 %v563, %v574
      %v581 = vmul.f32 %v564, %v574
      %v582 = vmul.f32 %v565, %v574
      %v583 = vmul.f32 %v566, %v574
      %v584 = vmul.f32 %v567, %v574
      %v585 = vmul.f32 %v568, %v574
      %v586 = vmul.f32 %v569, %v574
      %v587 = vmul.f32 %v570, %v574
      %v588 = vmul.f32 %v571, %v574
      %v589 = vmul.f32 %v572, %v574
      %v590 = vmul.f32 %v573, %v574
      %v591 = vadd.f32 %v542, %v575
      %v592 = vadd.f32 %v543, %v576
      %v593 = vadd.f32 %v544, %v577
      %v594 = vadd.f32 %v545, %v578
      %v595 = vadd.f32 %v546, %v579
      %v596 = vadd.f32 %v547, %v580
      %v597 = vadd.f32 %v548, %v581
      %v598 = vadd.f32 %v549, %v582
      %v599 = vadd.f32 %v550, %v583
      %v600 = vadd.f32 %v551, %v584
      %v601 = vadd.f32 %v552, %v585
      %v602 = vadd.f32 %v553, %v586
      %v603 = vadd.f32 %v554, %v587
      %v604 = vadd.f32 %v555, %v588
      %v605 = vadd.f32 %v556, %v589
      %v606 = vadd.f32 %v557, %v590
      %v607 = vld [vmem:[#allocation2 + $0x2] sm:$0xff]
      %v608 = vld [vmem:[#allocation2 + $0xa] sm:$0xff]
      %v609 = vld [vmem:[#allocation2 + $0x1a] sm:$0xff]
      %v610 = vld [vmem:[#allocation2 + $0x22] sm:$0xff]
      %v611 = vld [vmem:[#allocation2 + $0x32] sm:$0xff]
      %v612 = vld [vmem:[#allocation2 + $0x3a] sm:$0xff]
      %v613 = vld [vmem:[#allocation2 + $0x4a] sm:$0xff]
      %v614 = vld [vmem:[#allocation2 + $0x52] sm:$0xff]
      %v615 = vld [vmem:[#allocation2 + $0x62] sm:$0xff]
      %v616 = vld [vmem:[#allocation2 + $0x6a] sm:$0xff]
      %v617 = vld [vmem:[#allocation2 + $0x7a] sm:$0xff]
      %v618 = vld [vmem:[#allocation2 + $0x82] sm:$0xff]
      %v619 = vld [vmem:[#allocation2 + $0x92] sm:$0xff]
      %v620 = vld [vmem:[#allocation2 + $0x9a] sm:$0xff]
      %v621 = vld [vmem:[#allocation2 + $0xaa] sm:$0xff]
      %v622 = vld [vmem:[#allocation2 + $0xb2] sm:$0xff]
      %v623 = vperm.slane %v523, 2
      %v624 = vmul.f32 %v607, %v623
      %v625 = vmul.f32 %v608, %v623
      %v626 = vmul.f32 %v609, %v623
      %v627 = vmul.f32 %v610, %v623
      %v628 = vmul.f32 %v611, %v623
      %v629 = vmul.f32 %v612, %v623
      %v630 = vmul.f32 %v613, %v623
      %v631 = vmul.f32 %v614, %v623
      %v632 = vmul.f32 %v615, %v623
      %v633 = vmul.f32 %v616, %v623
      %v634 = vmul.f32 %v617, %v623
      %v635 = vmul.f32 %v618, %v623
      %v636 = vmul.f32 %v619, %v623
      %v637 = vmul.f32 %v620, %v623
      %v638 = vmul.f32 %v621, %v623
      %v639 = vmul.f32 %v622, %v623
      %v640 = vadd.f32 %v591, %v624
      %v641 = vadd.f32 %v592, %v625
      %v642 = vadd.f32 %v593, %v626
      %v643 = vadd.f32 %v594, %v627
      %v644 = vadd.f32 %v595, %v628
      %v645 = vadd.f32 %v596, %v629
      %v646 = vadd.f32 %v597, %v630
      %v647 = vadd.f32 %v598, %v631
      %v648 = vadd.f32 %v599, %v632
      %v649 = vadd.f32 %v600, %v633
      %v650 = vadd.f32 %v601, %v634
      %v651 = vadd.f32 %v602, %v635
      %v652 = vadd.f32 %v603, %v636
      %v653 = vadd.f32 %v604, %v637
      %v654 = vadd.f32 %v605, %v638
      %v655 = vadd.f32 %v606, %v639
      %v656 = vld [vmem:[%s448] sm:$0xff]
      %v657 = vld [vmem:[%s448 + $0x8] sm:$0xff]
      %v658 = vld [vmem:[%s448 + $0x18] sm:$0xff]
      %v659 = vld [vmem:[%s448 + $0x20] sm:$0xff]
      %v660 = vld [vmem:[%s448 + $0x30] sm:$0xff]
      %v661 = vld [vmem:[%s448 + $0x38] sm:$0xff]
      %v662 = vld [vmem:[%s448 + $0x48] sm:$0xff]
      %v663 = vld [vmem:[%s448 + $0x50] sm:$0xff]
      %v664 = vld [vmem:[%s448 + $0x60] sm:$0xff]
      %v665 = vld [vmem:[%s448 + $0x68] sm:$0xff]
      %v666 = vld [vmem:[%s448 + $0x78] sm:$0xff]
      %v667 = vld [vmem:[%s448 + $0x80] sm:$0xff]
      %v668 = vld [vmem:[%s448 + $0x90] sm:$0xff]
      %v669 = vld [vmem:[%s448 + $0x98] sm:$0xff]
      %v670 = vld [vmem:[%s448 + $0xa8] sm:$0xff]
      %v671 = vld [vmem:[%s448 + $0xb0] sm:$0xff]
      %v672 = vperm.slane %v523, 3
      %v673 = vmul.f32 %v656, %v672
      %v674 = vmul.f32 %v657, %v672
      %v675 = vmul.f32 %v658, %v672
      %v676 = vmul.f32 %v659, %v672
      %v677 = vmul.f32 %v660, %v672
      %v678 = vmul.f32 %v661, %v672
      %v679 = vmul.f32 %v662, %v672
      %v680 = vmul.f32 %v663, %v672
      %v681 = vmul.f32 %v664, %v672
      %v682 = vmul.f32 %v665, %v672
      %v683 = vmul.f32 %v666, %v672
      %v684 = vmul.f32 %v667, %v672
      %v685 = vmul.f32 %v668, %v672
      %v686 = vmul.f32 %v669, %v672
      %v687 = vmul.f32 %v670, %v672
      %v688 = vmul.f32 %v671, %v672
      %v689 = vadd.f32 %v640, %v673
      %v690 = vadd.f32 %v641, %v674
      %v691 = vadd.f32 %v642, %v675
      %v692 = vadd.f32 %v643, %v676
      %v693 = vadd.f32 %v644, %v677
      %v694 = vadd.f32 %v645, %v678
      %v695 = vadd.f32 %v646, %v679
      %v696 = vadd.f32 %v647, %v680
      %v697 = vadd.f32 %v648, %v681
      %v698 = vadd.f32 %v649, %v682
      %v699 = vadd.f32 %v650, %v683
      %v700 = vadd.f32 %v651, %v684
      %v701 = vadd.f32 %v652, %v685
      %v702 = vadd.f32 %v653, %v686
      %v703 = vadd.f32 %v654, %v687
      %v704 = vadd.f32 %v655, %v688
      %v705 = vld [vmem:[%s448 + $0x1] sm:$0xff]
      %v706 = vld [vmem:[%s448 + $0x9] sm:$0xff]
      %v707 = vld [vmem:[%s448 + $0x19] sm:$0xff]
      %v708 = vld [vmem:[%s448 + $0x21] sm:$0xff]
      %v709 = vld [vmem:[%s448 + $0x31] sm:$0xff]
      %v710 = vld [vmem:[%s448 + $0x39] sm:$0xff]
      %v711 = vld [vmem:[%s448 + $0x49] sm:$0xff]
      %v712 = vld [vmem:[%s448 + $0x51] sm:$0xff]
      %v713 = vld [vmem:[%s448 + $0x61] sm:$0xff]
      %v714 = vld [vmem:[%s448 + $0x69] sm:$0xff]
      %v715 = vld [vmem:[%s448 + $0x79] sm:$0xff]
      %v716 = vld [vmem:[%s448 + $0x81] sm:$0xff]
      %v717 = vld [vmem:[%s448 + $0x91] sm:$0xff]
      %v718 = vld [vmem:[%s448 + $0x99] sm:$0xff]
      %v719 = vld [vmem:[%s448 + $0xa9] sm:$0xff]
      %v720 = vld [vmem:[%s448 + $0xb1] sm:$0xff]
      %v721 = vperm.slane %v523, 4
      %v722 = vmul.f32 %v705, %v721
      %v723 = vmul.f32 %v706, %v721
      %v724 = vmul.f32 %v707, %v721
      %v725 = vmul.f32 %v708, %v721
      %v726 = vmul.f32 %v709, %v721
      %v727 = vmul.f32 %v710, %v721
      %v728 = vmul.f32 %v711, %v721
      %v729 = vmul.f32 %v712, %v721
      %v730 = vmul.f32 %v713, %v721
      %v731 = vmul.f32 %v714, %v721
      %v732 = vmul.f32 %v715, %v721
      %v733 = vmul.f32 %v716, %v721
      %v734 = vmul.f32 %v717, %v721
      %v735 = vmul.f32 %v718, %v721
      %v736 = vmul.f32 %v719, %v721
      %v737 = vmul.f32 %v720, %v721
      %v738 = vadd.f32 %v689, %v722
      %v739 = vadd.f32 %v690, %v723
      %v740 = vadd.f32 %v691, %v724
      %v741 = vadd.f32 %v692, %v725
      %v742 = vadd.f32 %v693, %v726
      %v743 = vadd.f32 %v694, %v727
      %v744 = vadd.f32 %v695, %v728
      %v745 = vadd.f32 %v696, %v729
      %v746 = vadd.f32 %v697, %v730
      %v747 = vadd.f32 %v698, %v731
      %v748 = vadd.f32 %v699, %v732
      %v749 = vadd.f32 %v700, %v733
      %v750 = vadd.f32 %v701, %v734
      %v751 = vadd.f32 %v702, %v735
      %v752 = vadd.f32 %v703, %v736
      %v753 = vadd.f32 %v704, %v737
      %v754 = vld [vmem:[%s448 + $0x2] sm:$0xff]
      %v755 = vld [vmem:[%s448 + $0xa] sm:$0xff]
      %v756 = vld [vmem:[%s448 + $0x1a] sm:$0xff]
      %v757 = vld [vmem:[%s448 + $0x22] sm:$0xff]
      %v758 = vld [vmem:[%s448 + $0x32] sm:$0xff]
      %v759 = vld [vmem:[%s448 + $0x3a] sm:$0xff]
      %v760 = vld [vmem:[%s448 + $0x4a] sm:$0xff]
      %v761 = vld [vmem:[%s448 + $0x52] sm:$0xff]
      %v762 = vld [vmem:[%s448 + $0x62] sm:$0xff]
      %v763 = vld [vmem:[%s448 + $0x6a] sm:$0xff]
      %v764 = vld [vmem:[%s448 + $0x7a] sm:$0xff]
      %v765 = vld [vmem:[%s448 + $0x82] sm:$0xff]
      %v766 = vld [vmem:[%s448 + $0x92] sm:$0xff]
      %v767 = vld [vmem:[%s448 + $0x9a] sm:$0xff]
      %v768 = vld [vmem:[%s448 + $0xaa] sm:$0xff]
      %v769 = vld [vmem:[%s448 + $0xb2] sm:$0xff]
      %v770 = vperm.slane %v523, 5
      %v771 = vmul.f32 %v754, %v770
      %v772 = vmul.f32 %v755, %v770
      %v773 = vmul.f32 %v756, %v770
      %v774 = vmul.f32 %v757, %v770
      %v775 = vmul.f32 %v758, %v770
      %v776 = vmul.f32 %v759, %v770
      %v777 = vmul.f32 %v760, %v770
      %v778 = vmul.f32 %v761, %v770
      %v779 = vmul.f32 %v762, %v770
      %v780 = vmul.f32 %v763, %v770
      %v781 = vmul.f32 %v764, %v770
      %v782 = vmul.f32 %v765, %v770
      %v783 = vmul.f32 %v766, %v770
      %v784 = vmul.f32 %v767, %v770
      %v785 = vmul.f32 %v768, %v770
      %v786 = vmul.f32 %v769, %v770
      %v787 = vadd.f32 %v738, %v771
      %v788 = vadd.f32 %v739, %v772
      %v789 = vadd.f32 %v740, %v773
      %v790 = vadd.f32 %v741, %v774
      %v791 = vadd.f32 %v742, %v775
      %v792 = vadd.f32 %v743, %v776
      %v793 = vadd.f32 %v744, %v777
      %v794 = vadd.f32 %v745, %v778
      %v795 = vadd.f32 %v746, %v779
      %v796 = vadd.f32 %v747, %v780
      %v797 = vadd.f32 %v748, %v781
      %v798 = vadd.f32 %v749, %v782
      %v799 = vadd.f32 %v750, %v783
      %v800 = vadd.f32 %v751, %v784
      %v801 = vadd.f32 %v752, %v785
      %v802 = vadd.f32 %v753, %v786
      %s803 = scalar_lea.vmem [#allocation2], 48
      %v804 = vld [vmem:[%s803] sm:$0xff]
      %v805 = vld [vmem:[%s803 + $0x8] sm:$0xff]
      %v806 = vld [vmem:[%s803 + $0x18] sm:$0xff]
      %v807 = vld [vmem:[%s803 + $0x20] sm:$0xff]
      %v808 = vld [vmem:[%s803 + $0x30] sm:$0xff]
      %v809 = vld [vmem:[%s803 + $0x38] sm:$0xff]
      %v810 = vld [vmem:[%s803 + $0x48] sm:$0xff]
      %v811 = vld [vmem:[%s803 + $0x50] sm:$0xff]
      %v812 = vld [vmem:[%s803 + $0x60] sm:$0xff]
      %v813 = vld [vmem:[%s803 + $0x68] sm:$0xff]
      %v814 = vld [vmem:[%s803 + $0x78] sm:$0xff]
      %v815 = vld [vmem:[%s803 + $0x80] sm:$0xff]
      %v816 = vld [vmem:[%s803 + $0x90] sm:$0xff]
      %v817 = vld [vmem:[%s803 + $0x98] sm:$0xff]
      %v818 = vld [vmem:[%s803 + $0xa8] sm:$0xff]
      %v819 = vld [vmem:[%s803 + $0xb0] sm:$0xff]
      %v820 = vperm.slane %v523, 6
      %v821 = vmul.f32 %v804, %v820
      %v822 = vmul.f32 %v805, %v820
      %v823 = vmul.f32 %v806, %v820
      %v824 = vmul.f32 %v807, %v820
      %v825 = vmul.f32 %v808, %v820
      %v826 = vmul.f32 %v809, %v820
      %v827 = vmul.f32 %v810, %v820
      %v828 = vmul.f32 %v811, %v820
      %v829 = vmul.f32 %v812, %v820
      %v830 = vmul.f32 %v813, %v820
      %v831 = vmul.f32 %v814, %v820
      %v832 = vmul.f32 %v815, %v820
      %v833 = vmul.f32 %v816, %v820
      %v834 = vmul.f32 %v817, %v820
      %v835 = vmul.f32 %v818, %v820
      %v836 = vmul.f32 %v819, %v820
      %v837 = vadd.f32 %v787, %v821
      %v838 = vadd.f32 %v788, %v822
      %v839 = vadd.f32 %v789, %v823
      %v840 = vadd.f32 %v790, %v824
      %v841 = vadd.f32 %v791, %v825
      %v842 = vadd.f32 %v792, %v826
      %v843 = vadd.f32 %v793, %v827
      %v844 = vadd.f32 %v794, %v828
      %v845 = vadd.f32 %v795, %v829
      %v846 = vadd.f32 %v796, %v830
      %v847 = vadd.f32 %v797, %v831
      %v848 = vadd.f32 %v798, %v832
      %v849 = vadd.f32 %v799, %v833
      %v850 = vadd.f32 %v800, %v834
      %v851 = vadd.f32 %v801, %v835
      %v852 = vadd.f32 %v802, %v836
      %v853 = vld [vmem:[%s803 + $0x1] sm:$0xff]
      %v854 = vld [vmem:[%s803 + $0x9] sm:$0xff]
      %v855 = vld [vmem:[%s803 + $0x19] sm:$0xff]
      %v856 = vld [vmem:[%s803 + $0x21] sm:$0xff]
      %v857 = vld [vmem:[%s803 + $0x31] sm:$0xff]
      %v858 = vld [vmem:[%s803 + $0x39] sm:$0xff]
      %v859 = vld [vmem:[%s803 + $0x49] sm:$0xff]
      %v860 = vld [vmem:[%s803 + $0x51] sm:$0xff]
      %v861 = vld [vmem:[%s803 + $0x61] sm:$0xff]
      %v862 = vld [vmem:[%s803 + $0x69] sm:$0xff]
      %v863 = vld [vmem:[%s803 + $0x79] sm:$0xff]
      %v864 = vld [vmem:[%s803 + $0x81] sm:$0xff]
      %v865 = vld [vmem:[%s803 + $0x91] sm:$0xff]
      %v866 = vld [vmem:[%s803 + $0x99] sm:$0xff]
      %v867 = vld [vmem:[%s803 + $0xa9] sm:$0xff]
      %v868 = vld [vmem:[%s803 + $0xb1] sm:$0xff]
      %v869 = vperm.slane %v523, 7
      %v870 = vmul.f32 %v853, %v869
      %v871 = vmul.f32 %v854, %v869
      %v872 = vmul.f32 %v855, %v869
      %v873 = vmul.f32 %v856, %v869
      %v874 = vmul.f32 %v857, %v869
      %v875 = vmul.f32 %v858, %v869
      %v876 = vmul.f32 %v859, %v869
      %v877 = vmul.f32 %v860, %v869
      %v878 = vmul.f32 %v861, %v869
      %v879 = vmul.f32 %v862, %v869
      %v880 = vmul.f32 %v863, %v869
      %v881 = vmul.f32 %v864, %v869
      %v882 = vmul.f32 %v865, %v869
      %v883 = vmul.f32 %v866, %v869
      %v884 = vmul.f32 %v867, %v869
      %v885 = vmul.f32 %v868, %v869
      %v886 = vadd.f32 %v837, %v870
      %v887 = vadd.f32 %v838, %v871
      %v888 = vadd.f32 %v839, %v872
      %v889 = vadd.f32 %v840, %v873
      %v890 = vadd.f32 %v841, %v874
      %v891 = vadd.f32 %v842, %v875
      %v892 = vadd.f32 %v843, %v876
      %v893 = vadd.f32 %v844, %v877
      %v894 = vadd.f32 %v845, %v878
      %v895 = vadd.f32 %v846, %v879
      %v896 = vadd.f32 %v847, %v880
      %v897 = vadd.f32 %v848, %v881
      %v898 = vadd.f32 %v849, %v882
      %v899 = vadd.f32 %v850, %v883
      %v900 = vadd.f32 %v851, %v884
      %v901 = vadd.f32 %v852, %v885
      %v902 = vld [vmem:[%s803 + $0x2] sm:$0xff]
      %v903 = vld [vmem:[%s803 + $0xa] sm:$0xff]
      %v904 = vld [vmem:[%s803 + $0x1a] sm:$0xff]
      %v905 = vld [vmem:[%s803 + $0x22] sm:$0xff]
      %v906 = vld [vmem:[%s803 + $0x32] sm:$0xff]
      %v907 = vld [vmem:[%s803 + $0x3a] sm:$0xff]
      %v908 = vld [vmem:[%s803 + $0x4a] sm:$0xff]
      %v909 = vld [vmem:[%s803 + $0x52] sm:$0xff]
      %v910 = vld [vmem:[%s803 + $0x62] sm:$0xff]
      %v911 = vld [vmem:[%s803 + $0x6a] sm:$0xff]
      %v912 = vld [vmem:[%s803 + $0x7a] sm:$0xff]
      %v913 = vld [vmem:[%s803 + $0x82] sm:$0xff]
      %v914 = vld [vmem:[%s803 + $0x92] sm:$0xff]
      %v915 = vld [vmem:[%s803 + $0x9a] sm:$0xff]
      %v916 = vld [vmem:[%s803 + $0xaa] sm:$0xff]
      %v917 = vld [vmem:[%s803 + $0xb2] sm:$0xff]
      %v918 = vperm.slane %v524, 0
      %v919 = vmul.f32 %v902, %v918
      %v920 = vmul.f32 %v903, %v918
      %v921 = vmul.f32 %v904, %v918
      %v922 = vmul.f32 %v905, %v918
      %v923 = vmul.f32 %v906, %v918
      %v924 = vmul.f32 %v907, %v918
      %v925 = vmul.f32 %v908, %v918
      %v926 = vmul.f32 %v909, %v918
      %v927 = vmul.f32 %v910, %v918
      %v928 = vmul.f32 %v911, %v918
      %v929 = vmul.f32 %v912, %v918
      %v930 = vmul.f32 %v913, %v918
      %v931 = vmul.f32 %v914, %v918
      %v932 = vmul.f32 %v915, %v918
      %v933 = vmul.f32 %v916, %v918
      %v934 = vmul.f32 %v917, %v918
      %v935 = vadd.f32 %v886, %v919
      %v936 = vadd.f32 %v887, %v920
      %v937 = vadd.f32 %v888, %v921
      %v938 = vadd.f32 %v889, %v922
      %v939 = vadd.f32 %v890, %v923
      %v940 = vadd.f32 %v891, %v924
      %v941 = vadd.f32 %v892, %v925
      %v942 = vadd.f32 %v893, %v926
      %v943 = vadd.f32 %v894, %v927
      %v944 = vadd.f32 %v895, %v928
      %v945 = vadd.f32 %v896, %v929
      %v946 = vadd.f32 %v897, %v930
      %v947 = vadd.f32 %v898, %v931
      %v948 = vadd.f32 %v899, %v932
      %v949 = vadd.f32 %v900, %v933
      %v950 = vadd.f32 %v901, %v934
      %v951 = vld [vmem:[%s5] sm:$0xff]
      %v953 = vsel %vm449, %v935, 0
      %v956 = vsel %vm449, %v936, 0
      %v959 = vsel %vm449, %v937, 0
      %v962 = vsel %vm449, %v938, 0
      %v965 = vsel %vm449, %v939, 0
      %v968 = vsel %vm449, %v940, 0
      %v971 = vsel %vm449, %v941, 0
      %v974 = vsel %vm449, %v942, 0
      %v977 = vsel %vm449, %v943, 0
      %v980 = vsel %vm449, %v944, 0
      %v983 = vsel %vm449, %v945, 0
      %v986 = vsel %vm449, %v946, 0
      %v989 = vsel %vm449, %v947, 0
      %v992 = vsel %vm449, %v948, 0
      %v995 = vsel %vm449, %v949, 0
      %v998 = vsel %vm449, %v950, 0
      %1000 = vmatpush.msra.mxu0 0.0
      %1001 = vmatpush.msra.mxu0 0.0
      %1002 = vmatpush.msra.mxu0 0.0
      %1003 = vmatpush.msra.mxu0 0.0
      %1004 = vmatpush.msra.mxu0 0.0
      %1005 = vmatpush.msra.mxu0 0.0
      %1006 = vmatpush.msra.mxu0 0.0
      %1007 = vmatpush.msra.mxu0 0.0
      %1008 = vmatpush.msra.mxu0 0.0
      %1009 = vmatpush.msra.mxu0 0.0
      %1010 = vmatpush.msra.mxu0 0.0
      %1011 = vmatpush.msra.mxu0 0.0
      %1012 = vmatpush.msra.mxu0 0.0
      %1013 = vmatpush.msra.mxu0 0.0
      %1014 = vmatpush.msra.mxu0 0.0
      %1015 = vmatpush.msra.mxu0 %v951
      %1016 = vmatmul.f32.gmra.mxu0 %v953
      %v1017 = vpop.f32.mrf.mxu0
      %v1018 = vadd.f32 0.0, %v1017
      %1019 = vmatmul.f32.gmra.mxu0 %v956
      %v1020 = vpop.f32.mrf.mxu0
      %v1021 = vadd.f32 0.0, %v1020
      %1022 = vmatmul.f32.gmra.mxu0 %v959
      %v1023 = vpop.f32.mrf.mxu0
      %v1024 = vadd.f32 0.0, %v1023
      %1025 = vmatmul.f32.gmra.mxu0 %v962
      %v1026 = vpop.f32.mrf.mxu0
      %v1027 = vadd.f32 0.0, %v1026
      %1028 = vmatmul.f32.gmra.mxu0 %v965
      %v1029 = vpop.f32.mrf.mxu0
      %v1030 = vadd.f32 0.0, %v1029
      %1031 = vmatmul.f32.gmra.mxu0 %v968
      %v1032 = vpop.f32.mrf.mxu0
      %v1033 = vadd.f32 0.0, %v1032
      %1034 = vmatmul.f32.gmra.mxu0 %v971
      %v1035 = vpop.f32.mrf.mxu0
      %v1036 = vadd.f32 0.0, %v1035
      %1037 = vmatmul.f32.gmra.mxu0 %v974
      %v1038 = vpop.f32.mrf.mxu0
      %v1039 = vadd.f32 0.0, %v1038
      %1040 = vmatmul.f32.gmra.mxu0 %v977
      %v1041 = vpop.f32.mrf.mxu0
      %v1042 = vadd.f32 0.0, %v1041
      %1043 = vmatmul.f32.gmra.mxu0 %v980
      %v1044 = vpop.f32.mrf.mxu0
      %v1045 = vadd.f32 0.0, %v1044
      %1046 = vmatmul.f32.gmra.mxu0 %v983
      %v1047 = vpop.f32.mrf.mxu0
      %v1048 = vadd.f32 0.0, %v1047
      %1049 = vmatmul.f32.gmra.mxu0 %v986
      %v1050 = vpop.f32.mrf.mxu0
      %v1051 = vadd.f32 0.0, %v1050
      %1052 = vmatmul.f32.gmra.mxu0 %v989
      %v1053 = vpop.f32.mrf.mxu0
      %v1054 = vadd.f32 0.0, %v1053
      %1055 = vmatmul.f32.gmra.mxu0 %v992
      %v1056 = vpop.f32.mrf.mxu0
      %v1057 = vadd.f32 0.0, %v1056
      %1058 = vmatmul.f32.gmra.mxu0 %v995
      %v1059 = vpop.f32.mrf.mxu0
      %v1060 = vadd.f32 0.0, %v1059
      %1061 = vmatmul.f32.gmra.mxu0 %v998
      %v1062 = vpop.f32.mrf.mxu0
      %v1063 = vadd.f32 0.0, %v1062
      %1064 = vdwg.mxu0
      %vm1065 = vcmask 130048
      %1066 = vst.msk [vmem:[%s430] sm:$0xff] %vm1065, %v1018
      %1067 = vst.msk [vmem:[%s430 + $0x8] sm:$0xff] %vm1065, %v1021
      %1068 = vst.msk [vmem:[%s430 + $0x10] sm:$0xff] %vm1065, %v1024
      %1069 = vst.msk [vmem:[%s430 + $0x18] sm:$0xff] %vm1065, %v1027
      %1070 = vst.msk [vmem:[%s430 + $0x20] sm:$0xff] %vm1065, %v1030
      %1071 = vst.msk [vmem:[%s430 + $0x28] sm:$0xff] %vm1065, %v1033
      %1072 = vst.msk [vmem:[%s430 + $0x30] sm:$0xff] %vm1065, %v1036
      %1073 = vst.msk [vmem:[%s430 + $0x38] sm:$0xff] %vm1065, %v1039
      %1074 = vst.msk [vmem:[%s430 + $0x40] sm:$0xff] %vm1065, %v1042
      %1075 = vst.msk [vmem:[%s430 + $0x48] sm:$0xff] %vm1065, %v1045
      %1076 = vst.msk [vmem:[%s430 + $0x50] sm:$0xff] %vm1065, %v1048
      %1077 = vst.msk [vmem:[%s430 + $0x58] sm:$0xff] %vm1065, %v1051
      %1078 = vst.msk [vmem:[%s430 + $0x60] sm:$0xff] %vm1065, %v1054
      %1079 = vst.msk [vmem:[%s430 + $0x68] sm:$0xff] %vm1065, %v1057
      %1080 = vst.msk [vmem:[%s430 + $0x70] sm:$0xff] %vm1065, %v1060
      %1081 = vst.msk [vmem:[%s430 + $0x78] sm:$0xff] %vm1065, %v1063
      %s1082 = smul.u32 16, %s22
      %p1083 = scmp.lt.s32.totalorder %s21, 1
      %s1084 = scalar_select %p1083, %s21, 1
      %p1085 = scmp.lt.s32.totalorder %s1082, 31
      %s1086 = scalar_select %p1085, %s1082, 31
      %s1087 = smul.addr %s1084, 32
      %s1088 = sadd.s32 %s1086, %s1087
      %s1089 = smul.addr %s1088, 8
      %s1090 = scalar_lea.vmem %s6, %s1089
      // Predicated region
      $region61: #{tpu_custom_call.1} parent=43 // pred_check
        %p1091 = pneg %p217
      $region62: #{tpu_custom_call.1} parent=43 // pred_check_branch
        %1093 = sbr.rel (%p1091) target = $region64
      $region63: #{tpu_custom_call.1} parent=43 // pred_region
        %s1094 = smul.u32 16, %s22
      $region64: #{tpu_custom_call.1} parent=43 // pred_fallthru
        _
    $region44: #{tpu_custom_call.1} parent=5 // pred_fallthru
      _
    %p1095 = scmp.le.s32.totalorder 2, %s12
    // Predicated region
    $region65: #{tpu_custom_call.1} parent=5 // pred_check
      %p1096 = pneg %p1095
    $region66: #{tpu_custom_call.1} parent=5 // pred_check_branch
      %1098 = sbr.rel (%p1096) target = $region68
    $region67: #{tpu_custom_call.1} parent=5 // pred_region
      %s1099 = ssub.s32 %s12, 2
      // Predicated region
      $region69: #{tpu_custom_call.1} parent=67 // pred_check
        %p1100 = pneg %p223
      $region70: #{tpu_custom_call.1} parent=67 // pred_check_branch
        %1102 = sbr.rel (%p1100) target = $region72
      $region71: #{tpu_custom_call.1} parent=67 // pred_region
        %s1103 = smul.u32 16, %s24
        %p1104 = scmp.lt.s32.totalorder %s23, 1
        %s1105 = scalar_select %p1104, %s23, 1
        %p1106 = scmp.lt.s32.totalorder %s1103, 31
        %s1107 = scalar_select %p1106, %s1103, 31
        %s1108 = smul.addr %s1105, 32
        %s1109 = sadd.s32 %s1107, %s1108
        %s1110 = smul.addr %s1109, 8
        %s1111 = scalar_lea.vmem %s6, %s1110
      $region72: #{tpu_custom_call.1} parent=67 // pred_fallthru
        _
    $region68: #{tpu_custom_call.1} parent=5 // pred_fallthru
      _
  $region6: #{tpu_custom_call.1} parent=0 // loop_footer
    %s16 = sadd.s32 1, %s12
  $region7: #{tpu_custom_call.1} parent=0 // loop_footer_branch
    %11 = sbr.rel target = $region3
  $region8: #{tpu_custom_call.1} parent=0 // loop_exit
    _

</llo_original>
